<compile_context>
chip_gen: v5e
topology: v5e:2x2
jax: 0.10.0
libtpu: 0.0.40
codegen_flags: <defaults>
</compile_context>

<pallas_src>
import functools
import math

import jax
import jax.numpy as jnp
from jax.experimental import pallas as pl
from jax.experimental.pallas import tpu as pltpu


# ----------------------------- in-kernel helpers -----------------------------

def _erf(x):
    # Abramowitz & Stegun 7.1.26 polynomial erf (max abs err ~1.5e-7).
    # TODO(synk): polynomial approximation instead of lax.erf (whose Mosaic
    # lowering is not guaranteed); matches PyTorch's exact GELU to ~1e-7.
    ax = jnp.abs(x)
    t = 1.0 / (1.0 + 0.3275911 * ax)
    poly = ((((1.061405429 * t - 1.453152027) * t + 1.421413741) * t
             - 0.284496736) * t + 0.254829592) * t
    y = 1.0 - poly * jnp.exp(-ax * ax)
    return jnp.where(x >= 0, y, -y)


def _gelu_exact(x):
    # PyTorch F.gelu default ("exact", erf-based).
    return 0.5 * x * (1.0 + _erf(x * 0.7071067811865475))


def _layer_norm(x, gamma, beta, eps=1e-5):
    mu = jnp.mean(x, axis=-1, keepdims=True)
    xc = x - mu
    var = jnp.mean(xc * xc, axis=-1, keepdims=True)
    return xc * jax.lax.rsqrt(var + eps) * gamma + beta


# --------------------------------- the kernel --------------------------------

def _encoder_kernel(x_ref, wqkv_ref, bqkv_ref, wo_ref, w1_ref, b1_ref, w2_ref,
                    vecs_ref, o_ref, x_sc, *, batch, seq, heads):
    layer = pl.program_id(0)

    # Load the input activation once; afterwards it stays resident in VMEM.
    @pl.when(layer == 0)
    def _():
        x_sc[...] = x_ref[...]

    x = x_sc[...]                                 # (N, D) f32, N = B*S
    n, d = x.shape
    dh = d // heads
    scale = 1.0 / math.sqrt(dh)
    bf16 = jnp.bfloat16

    vecs = vecs_ref[...]                          # (6, D) f32 packed vectors
    b_out, g1, be1 = vecs[0:1], vecs[1:2], vecs[2:3]
    b2, g2, be2 = vecs[3:4], vecs[4:5], vecs[5:6]

    # --- self-attention (nn.MultiheadAttention, fused in_proj) ---------------
    # bf16 MXU feeds, f32 accumulation; weights are already (D, 3D) -> no .T.
    qkv = jnp.dot(x.astype(bf16), wqkv_ref[...],
                  preferred_element_type=jnp.float32) + bqkv_ref[...]   # (N,3D)

    # TODO(synk): heads handled by a static loop over dh-wide lane slices; a
    # fully batched (B*H, S, dh) layout needs a sublane transpose whose Mosaic
    # lowering is not guaranteed at these tiny head dims.
    ctx_parts = []
    for h in range(heads):
        qh = (qkv[:, h * dh:(h + 1) * dh] * scale
              ).reshape(batch, seq, dh).astype(bf16)
        kh = qkv[:, d + h * dh:d + (h + 1) * dh
                 ].reshape(batch, seq, dh).astype(bf16)
        vh = qkv[:, 2 * d + h * dh:2 * d + (h + 1) * dh
                 ].reshape(batch, seq, dh).astype(bf16)
        s = jnp.einsum('bqd,bkd->bqk', qh, kh,
                       preferred_element_type=jnp.float32)              # (B,S,S)
        s = s - jnp.max(s, axis=-1, keepdims=True)                      # f32 stats
        e = jnp.exp(s)
        p = e * pl.reciprocal(jnp.sum(e, axis=-1, keepdims=True), approx=True)
        ctx_h = jnp.einsum('bqk,bkd->bqd', p.astype(bf16), vh,
                           preferred_element_type=jnp.float32)          # (B,S,dh)
        ctx_parts.append(ctx_h.reshape(n, dh))
    ctx = jnp.concatenate(ctx_parts, axis=-1)                           # (N, D)

    attn = jnp.dot(ctx.astype(bf16), wo_ref[...],
                   preferred_element_type=jnp.float32) + b_out          # (N, D)

    # --- residual + LayerNorm (post-norm, norm_first=False) ------------------
    x1 = _layer_norm(x + attn, g1, be1)

    # --- feed-forward: linear1 -> exact GELU -> linear2 ----------------------
    h1 = jnp.dot(x1.astype(bf16), w1_ref[...],
                 preferred_element_type=jnp.float32) + b1_ref[...]      # (N,mlp)
    h1 = _gelu_exact(h1)
    ff = jnp.dot(h1.astype(bf16), w2_ref[...],
                 preferred_element_type=jnp.float32) + b2               # (N, D)

    # --- residual + LayerNorm -------------------------------------------------
    x2 = _layer_norm(x1 + ff, g2, be2)
    x_sc[...] = x2                                 # carry to next layer

    @pl.when(layer == pl.num_programs(0) - 1)
    def _():
        o_ref[...] = x2.astype(o_ref.dtype)


# ------------------------------- host wrapper ---------------------------------

def trans_encoder(x, params, heads):
    """Forward pass of TransEncoder: `depth` post-norm encoder layers, fused."""
    B, S, D = x.shape
    depth = params["w_qkv_t"].shape[0]
    mlp = params["w1_t"].shape[2]
    N = B * S
    assert D % heads == 0

    kernel = functools.partial(_encoder_kernel, batch=B, seq=S, heads=heads)

    # Advisory cost estimate (helps XLA schedule around the custom call).
    flops = depth * (2 * N * D * (4 * D + 2 * mlp) + 4 * B * S * S * D)
    transcendentals = depth * (B * heads * S * S + N * mlp)
    bytes_accessed = (2 * N * D * 4                          # activation in/out
                      + depth * (4 * D * D + 2 * D * mlp) * 2  # bf16 weights
                      + depth * (9 * D + mlp) * 4)             # f32 biases/LN

    def wspec(shape):
        # per-layer operand: leading depth axis squeezed, block index = layer.
        return pl.BlockSpec((None,) + shape, lambda l: (l,) + (0,) * len(shape))

    out = pl.pallas_call(
        kernel,
        out_shape=jax.ShapeDtypeStruct((N, D), x.dtype),
        grid_spec=pltpu.PrefetchScalarGridSpec(
            num_scalar_prefetch=0,
            grid=(depth,),
            in_specs=[
                pl.BlockSpec((N, D), lambda l: (0, 0)),   # x (read at l==0 only)
                wspec((D, 3 * D)),                        # W_qkv^T   (bf16)
                wspec((1, 3 * D)),                        # in_proj bias (f32)
                wspec((D, D)),                            # W_out^T   (bf16)
                wspec((D, mlp)),                          # W1^T      (bf16)
                wspec((1, mlp)),                          # b1        (f32)
                wspec((mlp, D)),                          # W2^T      (bf16)
                wspec((6, D)),                            # packed b_out/ln1/b2/ln2
            ],
            out_specs=pl.BlockSpec((N, D), lambda l: (0, 0)),
            scratch_shapes=[pltpu.VMEM((N, D), jnp.float32)],  # resident activation
        ),
        compiler_params=pltpu.CompilerParams(
            dimension_semantics=("arbitrary",),           # layers are sequential
            vmem_limit_bytes=32 * 1024 * 1024),
        cost_estimate=pl.CostEstimate(flops=flops,
                                      transcendentals=transcendentals,
                                      bytes_accessed=bytes_accessed),
    )(x.reshape(N, D),
      params["w_qkv_t"], params["b_qkv"], params["w_out_t"],
      params["w1_t"], params["b1"], params["w2_t"], params["vecs"])
    return out.reshape(B, S, D)


# ------------------------- parameter init / packing ---------------------------

def init_params(key, dim, depth, heads, mlp_dim):
    """Random per-layer parameters in PyTorch TransformerEncoderLayer layout."""
    assert dim % heads == 0
    layers = []
    for l in range(depth):
        ks = jax.random.split(jax.random.fold_in(key, l), 8)
        layers.append(dict(
            w_qkv=0.02 * jax.random.normal(ks[0], (3 * dim, dim), jnp.float32),  # in_proj_weight
            b_qkv=0.02 * jax.random.normal(ks[1], (3 * dim,), jnp.float32),      # in_proj_bias
            w_out=0.02 * jax.random.normal(ks[2], (dim, dim), jnp.float32),      # out_proj.weight
            b_out=0.02 * jax.random.normal(ks[3], (dim,), jnp.float32),
            ln1_g=jnp.ones((dim,), jnp.float32),
            ln1_b=jnp.zeros((dim,), jnp.float32),
            w1=0.02 * jax.random.normal(ks[4], (mlp_dim, dim), jnp.float32),     # linear1.weight
            b1=0.02 * jax.random.normal(ks[5], (mlp_dim,), jnp.float32),
            w2=0.02 * jax.random.normal(ks[6], (dim, mlp_dim), jnp.float32),     # linear2.weight
            b2=0.02 * jax.random.normal(ks[7], (dim,), jnp.float32),
            ln2_g=jnp.ones((dim,), jnp.float32),
            ln2_b=jnp.zeros((dim,), jnp.float32),
        ))
    return layers


def pack_params(layers):
    """Stack per-layer PyTorch-layout params into the kernel layout:
    pre-transposed bf16 weights (no in-kernel .T, half the DMA bytes) and
    packed f32 bias / LayerNorm vectors."""
    def stack(name):
        return jnp.stack([p[name] for p in layers])
    return dict(
        w_qkv_t=jnp.transpose(stack("w_qkv"), (0, 2, 1)).astype(jnp.bfloat16),  # (L, D, 3D)
        w_out_t=jnp.transpose(stack("w_out"), (0, 2, 1)).astype(jnp.bfloat16),  # (L, D, D)
        w1_t=jnp.transpose(stack("w1"), (0, 2, 1)).astype(jnp.bfloat16),        # (L, D, mlp)
        w2_t=jnp.transpose(stack("w2"), (0, 2, 1)).astype(jnp.bfloat16),        # (L, mlp, D)
        b_qkv=stack("b_qkv")[:, None, :],                                       # (L, 1, 3D) f32
        b1=stack("b1")[:, None, :],                                             # (L, 1, mlp) f32
        vecs=jnp.stack([jnp.stack([p["b_out"], p["ln1_g"], p["ln1_b"],
                                   p["b2"], p["ln2_g"], p["ln2_b"]])
                        for p in layers]),                                      # (L, 6, D) f32
    )


if __name__ == "__main__":
    # TransEncoder(dim=32, depth=2, heads=4, mlp_dim=64, dropout=0.0)
    B, S = 2, 8
    dim, depth, heads, mlp_dim = 32, 2, 4, 64

    key = jax.random.PRNGKey(0)
    torch_layout = init_params(key, dim, depth, heads, mlp_dim)
    params = pack_params(torch_layout)
    x = jax.random.normal(jax.random.fold_in(key, 999), (B, S, dim), jnp.float32)

    y = trans_encoder(x, params, heads=heads)
    y = jax.block_until_ready(y)
    assert y.shape == (B, S, dim) and y.dtype == jnp.float32
    assert bool(jnp.all(jnp.isfinite(y)))
    print("KERNEL_OK")
</pallas_src>

<mosaic_0001>
module attributes {stable_mosaic.version = 11 : i64} {
  func.func @_encoder_kernel(%arg0: i32, %arg1: memref<16x32xf32, #tpu.memory_space<vmem>>, %arg2: memref<1x32x96xbf16, #tpu.memory_space<vmem>>, %arg3: memref<1x1x96xf32, #tpu.memory_space<vmem>>, %arg4: memref<1x32x32xbf16, #tpu.memory_space<vmem>>, %arg5: memref<1x32x64xbf16, #tpu.memory_space<vmem>>, %arg6: memref<1x1x64xf32, #tpu.memory_space<vmem>>, %arg7: memref<1x64x32xbf16, #tpu.memory_space<vmem>>, %arg8: memref<1x6x32xf32, #tpu.memory_space<vmem>>, %arg9: memref<16x32xf32, #tpu.memory_space<vmem>>, %arg10: memref<16x32xf32, #tpu.memory_space<vmem>>) attributes {dimension_semantics = [#tpu.dimension_semantics<arbitrary>], iteration_bounds = array<i64: 2>, scalar_prefetch = 0 : i64, scratch_operands = 1 : i64, tpu.core_type = #tpu.core_type<tc>, window_params = [{pipeline_mode = #tpu.pipeline_mode<synchronous>, transform_indices = @transform_0, window_bounds = array<i64: 16, 32>}, {transform_indices = @transform_1, window_bounds = array<i64: 1, 32, 96>}, {transform_indices = @transform_2, window_bounds = array<i64: 1, 1, 96>}, {transform_indices = @transform_3, window_bounds = array<i64: 1, 32, 32>}, {transform_indices = @transform_4, window_bounds = array<i64: 1, 32, 64>}, {transform_indices = @transform_5, window_bounds = array<i64: 1, 1, 64>}, {transform_indices = @transform_6, window_bounds = array<i64: 1, 64, 32>}, {transform_indices = @transform_7, window_bounds = array<i64: 1, 6, 32>}, {pipeline_mode = #tpu.pipeline_mode<synchronous>, transform_indices = @transform_8, window_bounds = array<i64: 16, 32>}]} {
    %c0_i32 = arith.constant 0 : i32
    %0 = arith.cmpi eq, %arg0, %c0_i32 : i32
    %1 = arith.extui %0 : i1 to i32
    %c0_i32_0 = arith.constant 0 : i32
    %2 = arith.cmpi ne, %1, %c0_i32_0 : i32
    scf.if %2 {
      %c0_74 = arith.constant 0 : index
      %c0_75 = arith.constant 0 : index
      %227 = vector.load %arg1[%c0_74, %c0_75] : memref<16x32xf32, #tpu.memory_space<vmem>>, vector<16x32xf32>
      %c0_76 = arith.constant 0 : index
      %c0_77 = arith.constant 0 : index
      %228 = vector.load %arg10[%c0_76, %c0_77] : memref<16x32xf32, #tpu.memory_space<vmem>>, vector<16x32xf32>
      tpu.vector_store %arg10[%c0_76, %c0_77], %227 {strides = array<i32>} : memref<16x32xf32, #tpu.memory_space<vmem>>, vector<16x32xf32>,
    } else {
    }
    %c0 = arith.constant 0 : index
    %c0_1 = arith.constant 0 : index
    %3 = vector.load %arg10[%c0, %c0_1] : memref<16x32xf32, #tpu.memory_space<vmem>>, vector<16x32xf32>
    %c0_2 = arith.constant 0 : index
    %c0_3 = arith.constant 0 : index
    %c0_4 = arith.constant 0 : index
    %4 = vector.load %arg8[%c0_2, %c0_3, %c0_4] : memref<1x6x32xf32, #tpu.memory_space<vmem>>, vector<1x6x32xf32>
    %5 = vector.shape_cast %4 : vector<1x6x32xf32> to vector<6x32xf32>
    %6 = vector.extract_strided_slice %5 {offsets = [0, 0], sizes = [1, 32], strides = [1, 1]} : vector<6x32xf32> to vector<1x32xf32>
    %7 = vector.extract_strided_slice %5 {offsets = [1, 0], sizes = [1, 32], strides = [1, 1]} : vector<6x32xf32> to vector<1x32xf32>
    %8 = vector.extract_strided_slice %5 {offsets = [2, 0], sizes = [1, 32], strides = [1, 1]} : vector<6x32xf32> to vector<1x32xf32>
    %9 = vector.extract_strided_slice %5 {offsets = [3, 0], sizes = [1, 32], strides = [1, 1]} : vector<6x32xf32> to vector<1x32xf32>
    %10 = vector.extract_strided_slice %5 {offsets = [4, 0], sizes = [1, 32], strides = [1, 1]} : vector<6x32xf32> to vector<1x32xf32>
    %11 = vector.extract_strided_slice %5 {offsets = [5, 0], sizes = [1, 32], strides = [1, 1]} : vector<6x32xf32> to vector<1x32xf32>
    %12 = arith.truncf %3 : vector<16x32xf32> to vector<16x32xbf16>
    %c0_5 = arith.constant 0 : index
    %c0_6 = arith.constant 0 : index
    %c0_7 = arith.constant 0 : index
    %13 = vector.load %arg2[%c0_5, %c0_6, %c0_7] : memref<1x32x96xbf16, #tpu.memory_space<vmem>>, vector<1x32x96xbf16>
    %14 = vector.shape_cast %13 : vector<1x32x96xbf16> to vector<32x96xbf16>
    %cst = arith.constant dense<0.000000e+00> : vector<16x96xf32>
    %15 = tpu.matmul %12, %14, %cst {dimension_numbers = #tpu.dot_dimension_numbers<[1], [0], [0], [1], [0, 0, 1, 1], [], []>} : vector<16x32xbf16>, vector<32x96xbf16>, vector<16x96xf32> -> vector<16x96xf32>
    %c0_8 = arith.constant 0 : index
    %c0_9 = arith.constant 0 : index
    %c0_10 = arith.constant 0 : index
    %16 = vector.load %arg3[%c0_8, %c0_9, %c0_10] : memref<1x1x96xf32, #tpu.memory_space<vmem>>, vector<1x1x96xf32>
    %17 = vector.shape_cast %16 : vector<1x1x96xf32> to vector<1x96xf32>
    %18 = vector.broadcast %17 : vector<1x96xf32> to vector<16x96xf32>
    %19 = arith.addf %15, %18 : vector<16x96xf32>
    %20 = vector.extract_strided_slice %19 {offsets = [0, 0], sizes = [16, 8], strides = [1, 1]} : vector<16x96xf32> to vector<16x8xf32>
    %cst_11 = arith.constant 0.353553385 : f32
    %21 = vector.broadcast %cst_11 : f32 to vector<16x8xf32>
    %22 = arith.mulf %20, %21 : vector<16x8xf32>
    %23 = vector.shape_cast %22 : vector<16x8xf32> to vector<2x8x8xf32>
    %24 = arith.truncf %23 : vector<2x8x8xf32> to vector<2x8x8xbf16>
    %25 = vector.extract_strided_slice %19 {offsets = [0, 32], sizes = [16, 8], strides = [1, 1]} : vector<16x96xf32> to vector<16x8xf32>
    %26 = vector.shape_cast %25 : vector<16x8xf32> to vector<2x8x8xf32>
    %27 = arith.truncf %26 : vector<2x8x8xf32> to vector<2x8x8xbf16>
    %28 = vector.extract_strided_slice %19 {offsets = [0, 64], sizes = [16, 8], strides = [1, 1]} : vector<16x96xf32> to vector<16x8xf32>
    %29 = vector.shape_cast %28 : vector<16x8xf32> to vector<2x8x8xf32>
    %30 = arith.truncf %29 : vector<2x8x8xf32> to vector<2x8x8xbf16>
    "tpu.trace_start"() <{level = 10 : i32, message = "bqd,bkd->bqk"}> : () -> ()
    %cst_12 = arith.constant dense<0.000000e+00> : vector<2x8x8xf32>
    %31 = tpu.matmul %24, %27, %cst_12 {dimension_numbers = #tpu.dot_dimension_numbers<[2], [2], [1], [1], [0, 0, 0, 1, 1, 1], [0], [0]>} : vector<2x8x8xbf16>, vector<2x8x8xbf16>, vector<2x8x8xf32> -> vector<2x8x8xf32>
    "tpu.trace_stop"() : () -> ()
    %cst_13 = arith.constant dense<0xFF800000> : vector<2x8xf32>
    %32 = vector.multi_reduction <maximumf>, %31, %cst_13 [2] : vector<2x8x8xf32> to vector<2x8xf32>
    %33 = vector.shape_cast %32 : vector<2x8xf32> to vector<2x8x1xf32>
    %34 = vector.broadcast %33 : vector<2x8x1xf32> to vector<2x8x8xf32>
    %35 = arith.subf %31, %34 : vector<2x8x8xf32>
    %36 = math.exp %35 : vector<2x8x8xf32>
    %cst_14 = arith.constant dense<0.000000e+00> : vector<2x8xf32>
    %37 = vector.multi_reduction <add>, %36, %cst_14 [2] : vector<2x8x8xf32> to vector<2x8xf32>
    %38 = vector.shape_cast %37 : vector<2x8xf32> to vector<2x8x1xf32>
    %39 = tpu.reciprocal %38 {approx = true} : vector<2x8x1xf32> -> vector<2x8x1xf32>
    %40 = vector.broadcast %39 : vector<2x8x1xf32> to vector<2x8x8xf32>
    %41 = arith.mulf %36, %40 : vector<2x8x8xf32>
    %42 = arith.truncf %41 : vector<2x8x8xf32> to vector<2x8x8xbf16>
    "tpu.trace_start"() <{level = 10 : i32, message = "bqk,bkd->bqd"}> : () -> ()
    %cst_15 = arith.constant dense<0.000000e+00> : vector<2x8x8xf32>
    %43 = tpu.matmul %42, %30, %cst_15 {dimension_numbers = #tpu.dot_dimension_numbers<[2], [1], [1], [2], [0, 0, 0, 1, 1, 2], [0], [0]>} : vector<2x8x8xbf16>, vector<2x8x8xbf16>, vector<2x8x8xf32> -> vector<2x8x8xf32>
    "tpu.trace_stop"() : () -> ()
    %44 = vector.shape_cast %43 : vector<2x8x8xf32> to vector<16x8xf32>
    %45 = vector.extract_strided_slice %19 {offsets = [0, 8], sizes = [16, 8], strides = [1, 1]} : vector<16x96xf32> to vector<16x8xf32>
    %cst_16 = arith.constant 0.353553385 : f32
    %46 = vector.broadcast %cst_16 : f32 to vector<16x8xf32>
    %47 = arith.mulf %45, %46 : vector<16x8xf32>
    %48 = vector.shape_cast %47 : vector<16x8xf32> to vector<2x8x8xf32>
    %49 = arith.truncf %48 : vector<2x8x8xf32> to vector<2x8x8xbf16>
    %50 = vector.extract_strided_slice %19 {offsets = [0, 40], sizes = [16, 8], strides = [1, 1]} : vector<16x96xf32> to vector<16x8xf32>
    %51 = vector.shape_cast %50 : vector<16x8xf32> to vector<2x8x8xf32>
    %52 = arith.truncf %51 : vector<2x8x8xf32> to vector<2x8x8xbf16>
    %53 = vector.extract_strided_slice %19 {offsets = [0, 72], sizes = [16, 8], strides = [1, 1]} : vector<16x96xf32> to vector<16x8xf32>
    %54 = vector.shape_cast %53 : vector<16x8xf32> to vector<2x8x8xf32>
    %55 = arith.truncf %54 : vector<2x8x8xf32> to vector<2x8x8xbf16>
    "tpu.trace_start"() <{level = 10 : i32, message = "bqd,bkd->bqk"}> : () -> ()
    %cst_17 = arith.constant dense<0.000000e+00> : vector<2x8x8xf32>
    %56 = tpu.matmul %49, %52, %cst_17 {dimension_numbers = #tpu.dot_dimension_numbers<[2], [2], [1], [1], [0, 0, 0, 1, 1, 1], [0], [0]>} : vector<2x8x8xbf16>, vector<2x8x8xbf16>, vector<2x8x8xf32> -> vector<2x8x8xf32>
    "tpu.trace_stop"() : () -> ()
    %cst_18 = arith.constant dense<0xFF800000> : vector<2x8xf32>
    %57 = vector.multi_reduction <maximumf>, %56, %cst_18 [2] : vector<2x8x8xf32> to vector<2x8xf32>
    %58 = vector.shape_cast %57 : vector<2x8xf32> to vector<2x8x1xf32>
    %59 = vector.broadcast %58 : vector<2x8x1xf32> to vector<2x8x8xf32>
    %60 = arith.subf %56, %59 : vector<2x8x8xf32>
    %61 = math.exp %60 : vector<2x8x8xf32>
    %cst_19 = arith.constant dense<0.000000e+00> : vector<2x8xf32>
    %62 = vector.multi_reduction <add>, %61, %cst_19 [2] : vector<2x8x8xf32> to vector<2x8xf32>
    %63 = vector.shape_cast %62 : vector<2x8xf32> to vector<2x8x1xf32>
    %64 = tpu.reciprocal %63 {approx = true} : vector<2x8x1xf32> -> vector<2x8x1xf32>
    %65 = vector.broadcast %64 : vector<2x8x1xf32> to vector<2x8x8xf32>
    %66 = arith.mulf %61, %65 : vector<2x8x8xf32>
    %67 = arith.truncf %66 : vector<2x8x8xf32> to vector<2x8x8xbf16>
    "tpu.trace_start"() <{level = 10 : i32, message = "bqk,bkd->bqd"}> : () -> ()
    %cst_20 = arith.constant dense<0.000000e+00> : vector<2x8x8xf32>
    %68 = tpu.matmul %67, %55, %cst_20 {dimension_numbers = #tpu.dot_dimension_numbers<[2], [1], [1], [2], [0, 0, 0, 1, 1, 2], [0], [0]>} : vector<2x8x8xbf16>, vector<2x8x8xbf16>, vector<2x8x8xf32> -> vector<2x8x8xf32>
    "tpu.trace_stop"() : () -> ()
    %69 = vector.shape_cast %68 : vector<2x8x8xf32> to vector<16x8xf32>
    %70 = vector.extract_strided_slice %19 {offsets = [0, 16], sizes = [16, 8], strides = [1, 1]} : vector<16x96xf32> to vector<16x8xf32>
    %cst_21 = arith.constant 0.353553385 : f32
    %71 = vector.broadcast %cst_21 : f32 to vector<16x8xf32>
    %72 = arith.mulf %70, %71 : vector<16x8xf32>
    %73 = vector.shape_cast %72 : vector<16x8xf32> to vector<2x8x8xf32>
    %74 = arith.truncf %73 : vector<2x8x8xf32> to vector<2x8x8xbf16>
    %75 = vector.extract_strided_slice %19 {offsets = [0, 48], sizes = [16, 8], strides = [1, 1]} : vector<16x96xf32> to vector<16x8xf32>
    %76 = vector.shape_cast %75 : vector<16x8xf32> to vector<2x8x8xf32>
    %77 = arith.truncf %76 : vector<2x8x8xf32> to vector<2x8x8xbf16>
    %78 = vector.extract_strided_slice %19 {offsets = [0, 80], sizes = [16, 8], strides = [1, 1]} : vector<16x96xf32> to vector<16x8xf32>
    %79 = vector.shape_cast %78 : vector<16x8xf32> to vector<2x8x8xf32>
    %80 = arith.truncf %79 : vector<2x8x8xf32> to vector<2x8x8xbf16>
    "tpu.trace_start"() <{level = 10 : i32, message = "bqd,bkd->bqk"}> : () -> ()
    %cst_22 = arith.constant dense<0.000000e+00> : vector<2x8x8xf32>
    %81 = tpu.matmul %74, %77, %cst_22 {dimension_numbers = #tpu.dot_dimension_numbers<[2], [2], [1], [1], [0, 0, 0, 1, 1, 1], [0], [0]>} : vector<2x8x8xbf16>, vector<2x8x8xbf16>, vector<2x8x8xf32> -> vector<2x8x8xf32>
    "tpu.trace_stop"() : () -> ()
    %cst_23 = arith.constant dense<0xFF800000> : vector<2x8xf32>
    %82 = vector.multi_reduction <maximumf>, %81, %cst_23 [2] : vector<2x8x8xf32> to vector<2x8xf32>
    %83 = vector.shape_cast %82 : vector<2x8xf32> to vector<2x8x1xf32>
    %84 = vector.broadcast %83 : vector<2x8x1xf32> to vector<2x8x8xf32>
    %85 = arith.subf %81, %84 : vector<2x8x8xf32>
    %86 = math.exp %85 : vector<2x8x8xf32>
    %cst_24 = arith.constant dense<0.000000e+00> : vector<2x8xf32>
    %87 = vector.multi_reduction <add>, %86, %cst_24 [2] : vector<2x8x8xf32> to vector<2x8xf32>
    %88 = vector.shape_cast %87 : vector<2x8xf32> to vector<2x8x1xf32>
    %89 = tpu.reciprocal %88 {approx = true} : vector<2x8x1xf32> -> vector<2x8x1xf32>
    %90 = vector.broadcast %89 : vector<2x8x1xf32> to vector<2x8x8xf32>
    %91 = arith.mulf %86, %90 : vector<2x8x8xf32>
    %92 = arith.truncf %91 : vector<2x8x8xf32> to vector<2x8x8xbf16>
    "tpu.trace_start"() <{level = 10 : i32, message = "bqk,bkd->bqd"}> : () -> ()
    %cst_25 = arith.constant dense<0.000000e+00> : vector<2x8x8xf32>
    %93 = tpu.matmul %92, %80, %cst_25 {dimension_numbers = #tpu.dot_dimension_numbers<[2], [1], [1], [2], [0, 0, 0, 1, 1, 2], [0], [0]>} : vector<2x8x8xbf16>, vector<2x8x8xbf16>, vector<2x8x8xf32> -> vector<2x8x8xf32>
    "tpu.trace_stop"() : () -> ()
    %94 = vector.shape_cast %93 : vector<2x8x8xf32> to vector<16x8xf32>
    %95 = vector.extract_strided_slice %19 {offsets = [0, 24], sizes = [16, 8], strides = [1, 1]} : vector<16x96xf32> to vector<16x8xf32>
    %cst_26 = arith.constant 0.353553385 : f32
    %96 = vector.broadcast %cst_26 : f32 to vector<16x8xf32>
    %97 = arith.mulf %95, %96 : vector<16x8xf32>
    %98 = vector.shape_cast %97 : vector<16x8xf32> to vector<2x8x8xf32>
    %99 = arith.truncf %98 : vector<2x8x8xf32> to vector<2x8x8xbf16>
    %100 = vector.extract_strided_slice %19 {offsets = [0, 56], sizes = [16, 8], strides = [1, 1]} : vector<16x96xf32> to vector<16x8xf32>
    %101 = vector.shape_cast %100 : vector<16x8xf32> to vector<2x8x8xf32>
    %102 = arith.truncf %101 : vector<2x8x8xf32> to vector<2x8x8xbf16>
    %103 = vector.extract_strided_slice %19 {offsets = [0, 88], sizes = [16, 8], strides = [1, 1]} : vector<16x96xf32> to vector<16x8xf32>
    %104 = vector.shape_cast %103 : vector<16x8xf32> to vector<2x8x8xf32>
    %105 = arith.truncf %104 : vector<2x8x8xf32> to vector<2x8x8xbf16>
    "tpu.trace_start"() <{level = 10 : i32, message = "bqd,bkd->bqk"}> : () -> ()
    %cst_27 = arith.constant dense<0.000000e+00> : vector<2x8x8xf32>
    %106 = tpu.matmul %99, %102, %cst_27 {dimension_numbers = #tpu.dot_dimension_numbers<[2], [2], [1], [1], [0, 0, 0, 1, 1, 1], [0], [0]>} : vector<2x8x8xbf16>, vector<2x8x8xbf16>, vector<2x8x8xf32> -> vector<2x8x8xf32>
    "tpu.trace_stop"() : () -> ()
    %cst_28 = arith.constant dense<0xFF800000> : vector<2x8xf32>
    %107 = vector.multi_reduction <maximumf>, %106, %cst_28 [2] : vector<2x8x8xf32> to vector<2x8xf32>
    %108 = vector.shape_cast %107 : vector<2x8xf32> to vector<2x8x1xf32>
    %109 = vector.broadcast %108 : vector<2x8x1xf32> to vector<2x8x8xf32>
    %110 = arith.subf %106, %109 : vector<2x8x8xf32>
    %111 = math.exp %110 : vector<2x8x8xf32>
    %cst_29 = arith.constant dense<0.000000e+00> : vector<2x8xf32>
    %112 = vector.multi_reduction <add>, %111, %cst_29 [2] : vector<2x8x8xf32> to vector<2x8xf32>
    %113 = vector.shape_cast %112 : vector<2x8xf32> to vector<2x8x1xf32>
    %114 = tpu.reciprocal %113 {approx = true} : vector<2x8x1xf32> -> vector<2x8x1xf32>
    %115 = vector.broadcast %114 : vector<2x8x1xf32> to vector<2x8x8xf32>
    %116 = arith.mulf %111, %115 : vector<2x8x8xf32>
    %117 = arith.truncf %116 : vector<2x8x8xf32> to vector<2x8x8xbf16>
    "tpu.trace_start"() <{level = 10 : i32, message = "bqk,bkd->bqd"}> : () -> ()
    %cst_30 = arith.constant dense<0.000000e+00> : vector<2x8x8xf32>
    %118 = tpu.matmul %117, %105, %cst_30 {dimension_numbers = #tpu.dot_dimension_numbers<[2], [1], [1], [2], [0, 0, 0, 1, 1, 2], [0], [0]>} : vector<2x8x8xbf16>, vector<2x8x8xbf16>, vector<2x8x8xf32> -> vector<2x8x8xf32>
    "tpu.trace_stop"() : () -> ()
    %119 = vector.shape_cast %118 : vector<2x8x8xf32> to vector<16x8xf32>
    %120 = tpu.concatenate %44, %69, %94, %119 in 1 : vector<16x8xf32>, vector<16x8xf32>, vector<16x8xf32>, vector<16x8xf32> -> vector<16x32xf32>
    %121 = arith.truncf %120 : vector<16x32xf32> to vector<16x32xbf16>
    %c0_31 = arith.constant 0 : index
    %c0_32 = arith.constant 0 : index
    %c0_33 = arith.constant 0 : index
    %122 = vector.load %arg4[%c0_31, %c0_32, %c0_33] : memref<1x32x32xbf16, #tpu.memory_space<vmem>>, vector<1x32x32xbf16>
    %123 = vector.shape_cast %122 : vector<1x32x32xbf16> to vector<32x32xbf16>
    %cst_34 = arith.constant dense<0.000000e+00> : vector<16x32xf32>
    %124 = tpu.matmul %121, %123, %cst_34 {dimension_numbers = #tpu.dot_dimension_numbers<[1], [0], [0], [1], [0, 0, 1, 1], [], []>} : vector<16x32xbf16>, vector<32x32xbf16>, vector<16x32xf32> -> vector<16x32xf32>
    %125 = vector.broadcast %6 : vector<1x32xf32> to vector<16x32xf32>
    %126 = arith.addf %124, %125 : vector<16x32xf32>
    %127 = arith.addf %3, %126 : vector<16x32xf32>
    %cst_35 = arith.constant dense<0.000000e+00> : vector<16xf32>
    %128 = vector.multi_reduction <add>, %127, %cst_35 [1] : vector<16x32xf32> to vector<16xf32>
    %129 = vector.shape_cast %128 : vector<16xf32> to vector<16x1xf32>
    %cst_36 = arith.constant 3.200000e+01 : f32
    %130 = vector.broadcast %cst_36 : f32 to vector<16x1xf32>
    %131 = arith.divf %129, %130 : vector<16x1xf32>
    %132 = vector.broadcast %131 : vector<16x1xf32> to vector<16x32xf32>
    %133 = arith.subf %127, %132 : vector<16x32xf32>
    %134 = arith.mulf %133, %133 : vector<16x32xf32>
    %cst_37 = arith.constant dense<0.000000e+00> : vector<16xf32>
    %135 = vector.multi_reduction <add>, %134, %cst_37 [1] : vector<16x32xf32> to vector<16xf32>
    %136 = vector.shape_cast %135 : vector<16xf32> to vector<16x1xf32>
    %cst_38 = arith.constant 3.200000e+01 : f32
    %137 = vector.broadcast %cst_38 : f32 to vector<16x1xf32>
    %138 = arith.divf %136, %137 : vector<16x1xf32>
    %cst_39 = arith.constant 9.99999974E-6 : f32
    %139 = vector.broadcast %cst_39 : f32 to vector<16x1xf32>
    %140 = arith.addf %138, %139 : vector<16x1xf32>
    %141 = math.rsqrt %140 : vector<16x1xf32>
    %142 = vector.broadcast %141 : vector<16x1xf32> to vector<16x32xf32>
    %143 = arith.mulf %133, %142 : vector<16x32xf32>
    %144 = vector.broadcast %7 : vector<1x32xf32> to vector<16x32xf32>
    %145 = arith.mulf %143, %144 : vector<16x32xf32>
    %146 = vector.broadcast %8 : vector<1x32xf32> to vector<16x32xf32>
    %147 = arith.addf %145, %146 : vector<16x32xf32>
    %148 = arith.truncf %147 : vector<16x32xf32> to vector<16x32xbf16>
    %c0_40 = arith.constant 0 : index
    %c0_41 = arith.constant 0 : index
    %c0_42 = arith.constant 0 : index
    %149 = vector.load %arg5[%c0_40, %c0_41, %c0_42] : memref<1x32x64xbf16, #tpu.memory_space<vmem>>, vector<1x32x64xbf16>
    %150 = vector.shape_cast %149 : vector<1x32x64xbf16> to vector<32x64xbf16>
    %cst_43 = arith.constant dense<0.000000e+00> : vector<16x64xf32>
    %151 = tpu.matmul %148, %150, %cst_43 {dimension_numbers = #tpu.dot_dimension_numbers<[1], [0], [0], [1], [0, 0, 1, 1], [], []>} : vector<16x32xbf16>, vector<32x64xbf16>, vector<16x64xf32> -> vector<16x64xf32>
    %c0_44 = arith.constant 0 : index
    %c0_45 = arith.constant 0 : index
    %c0_46 = arith.constant 0 : index
    %152 = vector.load %arg6[%c0_44, %c0_45, %c0_46] : memref<1x1x64xf32, #tpu.memory_space<vmem>>, vector<1x1x64xf32>
    %153 = vector.shape_cast %152 : vector<1x1x64xf32> to vector<1x64xf32>
    %154 = vector.broadcast %153 : vector<1x64xf32> to vector<16x64xf32>
    %155 = arith.addf %151, %154 : vector<16x64xf32>
    %cst_47 = arith.constant 5.000000e-01 : f32
    %156 = vector.broadcast %cst_47 : f32 to vector<16x64xf32>
    %157 = arith.mulf %156, %155 : vector<16x64xf32>
    %cst_48 = arith.constant 0.707106769 : f32
    %158 = vector.broadcast %cst_48 : f32 to vector<16x64xf32>
    %159 = arith.mulf %155, %158 : vector<16x64xf32>
    %160 = math.absf %159 : vector<16x64xf32>
    %cst_49 = arith.constant 0.327591091 : f32
    %161 = vector.broadcast %cst_49 : f32 to vector<16x64xf32>
    %162 = arith.mulf %161, %160 : vector<16x64xf32>
    %cst_50 = arith.constant 1.000000e+00 : f32
    %163 = vector.broadcast %cst_50 : f32 to vector<16x64xf32>
    %164 = arith.addf %163, %162 : vector<16x64xf32>
    %cst_51 = arith.constant 1.000000e+00 : f32
    %165 = vector.broadcast %cst_51 : f32 to vector<16x64xf32>
    %166 = arith.divf %165, %164 : vector<16x64xf32>
    %cst_52 = arith.constant 1.06140542 : f32
    %167 = vector.broadcast %cst_52 : f32 to vector<16x64xf32>
    %168 = arith.mulf %167, %166 : vector<16x64xf32>
    %cst_53 = arith.constant 1.45315206 : f32
    %169 = vector.broadcast %cst_53 : f32 to vector<16x64xf32>
    %170 = arith.subf %168, %169 : vector<16x64xf32>
    %171 = arith.mulf %170, %166 : vector<16x64xf32>
    %cst_54 = arith.constant 1.42141378 : f32
    %172 = vector.broadcast %cst_54 : f32 to vector<16x64xf32>
    %173 = arith.addf %171, %172 : vector<16x64xf32>
    %174 = arith.mulf %173, %166 : vector<16x64xf32>
    %cst_55 = arith.constant 0.284496725 : f32
    %175 = vector.broadcast %cst_55 : f32 to vector<16x64xf32>
    %176 = arith.subf %174, %175 : vector<16x64xf32>
    %177 = arith.mulf %176, %166 : vector<16x64xf32>
    %cst_56 = arith.constant 0.254829586 : f32
    %178 = vector.broadcast %cst_56 : f32 to vector<16x64xf32>
    %179 = arith.addf %177, %178 : vector<16x64xf32>
    %180 = arith.mulf %179, %166 : vector<16x64xf32>
    %cst_57 = arith.constant 0.000000e+00 : f32
    %181 = vector.broadcast %cst_57 : f32 to vector<16x64xf32>
    %182 = arith.subf %181, %160 : vector<16x64xf32>
    %183 = arith.mulf %182, %160 : vector<16x64xf32>
    %184 = math.exp %183 : vector<16x64xf32>
    %185 = arith.mulf %180, %184 : vector<16x64xf32>
    %cst_58 = arith.constant 1.000000e+00 : f32
    %186 = vector.broadcast %cst_58 : f32 to vector<16x64xf32>
    %187 = arith.subf %186, %185 : vector<16x64xf32>
    %cst_59 = arith.constant 0.000000e+00 : f32
    %188 = vector.broadcast %cst_59 : f32 to vector<16x64xf32>
    %189 = arith.cmpf oge, %159, %188 : vector<16x64xf32>
    %cst_60 = arith.constant 0.000000e+00 : f32
    %190 = vector.broadcast %cst_60 : f32 to vector<16x64xf32>
    %191 = arith.subf %190, %187 : vector<16x64xf32>
    %192 = arith.select %189, %187, %191 : vector<16x64xi1>, vector<16x64xf32>
    %cst_61 = arith.constant 1.000000e+00 : f32
    %193 = vector.broadcast %cst_61 : f32 to vector<16x64xf32>
    %194 = arith.addf %193, %192 : vector<16x64xf32>
    %195 = arith.mulf %157, %194 : vector<16x64xf32>
    %196 = arith.truncf %195 : vector<16x64xf32> to vector<16x64xbf16>
    %c0_62 = arith.constant 0 : index
    %c0_63 = arith.constant 0 : index
    %c0_64 = arith.constant 0 : index
    %197 = vector.load %arg7[%c0_62, %c0_63, %c0_64] : memref<1x64x32xbf16, #tpu.memory_space<vmem>>, vector<1x64x32xbf16>
    %198 = vector.shape_cast %197 : vector<1x64x32xbf16> to vector<64x32xbf16>
    %cst_65 = arith.constant dense<0.000000e+00> : vector<16x32xf32>
    %199 = tpu.matmul %196, %198, %cst_65 {dimension_numbers = #tpu.dot_dimension_numbers<[1], [0], [0], [1], [0, 0, 1, 1], [], []>} : vector<16x64xbf16>, vector<64x32xbf16>, vector<16x32xf32> -> vector<16x32xf32>
    %200 = vector.broadcast %9 : vector<1x32xf32> to vector<16x32xf32>
    %201 = arith.addf %199, %200 : vector<16x32xf32>
    %202 = arith.addf %147, %201 : vector<16x32xf32>
    %cst_66 = arith.constant dense<0.000000e+00> : vector<16xf32>
    %203 = vector.multi_reduction <add>, %202, %cst_66 [1] : vector<16x32xf32> to vector<16xf32>
    %204 = vector.shape_cast %203 : vector<16xf32> to vector<16x1xf32>
    %cst_67 = arith.constant 3.200000e+01 : f32
    %205 = vector.broadcast %cst_67 : f32 to vector<16x1xf32>
    %206 = arith.divf %204, %205 : vector<16x1xf32>
    %207 = vector.broadcast %206 : vector<16x1xf32> to vector<16x32xf32>
    %208 = arith.subf %202, %207 : vector<16x32xf32>
    %209 = arith.mulf %208, %208 : vector<16x32xf32>
    %cst_68 = arith.constant dense<0.000000e+00> : vector<16xf32>
    %210 = vector.multi_reduction <add>, %209, %cst_68 [1] : vector<16x32xf32> to vector<16xf32>
    %211 = vector.shape_cast %210 : vector<16xf32> to vector<16x1xf32>
    %cst_69 = arith.constant 3.200000e+01 : f32
    %212 = vector.broadcast %cst_69 : f32 to vector<16x1xf32>
    %213 = arith.divf %211, %212 : vector<16x1xf32>
    %cst_70 = arith.constant 9.99999974E-6 : f32
    %214 = vector.broadcast %cst_70 : f32 to vector<16x1xf32>
    %215 = arith.addf %213, %214 : vector<16x1xf32>
    %216 = math.rsqrt %215 : vector<16x1xf32>
    %217 = vector.broadcast %216 : vector<16x1xf32> to vector<16x32xf32>
    %218 = arith.mulf %208, %217 : vector<16x32xf32>
    %219 = vector.broadcast %10 : vector<1x32xf32> to vector<16x32xf32>
    %220 = arith.mulf %218, %219 : vector<16x32xf32>
    %221 = vector.broadcast %11 : vector<1x32xf32> to vector<16x32xf32>
    %222 = arith.addf %220, %221 : vector<16x32xf32>
    %c0_71 = arith.constant 0 : index
    %c0_72 = arith.constant 0 : index
    %223 = vector.load %arg10[%c0_71, %c0_72] : memref<16x32xf32, #tpu.memory_space<vmem>>, vector<16x32xf32>
    tpu.vector_store %arg10[%c0_71, %c0_72], %222 {strides = array<i32>} : memref<16x32xf32, #tpu.memory_space<vmem>>, vector<16x32xf32>,
    %c1_i32 = arith.constant 1 : i32
    %224 = arith.cmpi eq, %arg0, %c1_i32 : i32
    %225 = arith.extui %224 : i1 to i32
    %c0_i32_73 = arith.constant 0 : i32
    %226 = arith.cmpi ne, %225, %c0_i32_73 : i32
    scf.if %226 {
      %c0_74 = arith.constant 0 : index
      %c0_75 = arith.constant 0 : index
      %227 = vector.load %arg9[%c0_74, %c0_75] : memref<16x32xf32, #tpu.memory_space<vmem>>, vector<16x32xf32>
      tpu.vector_store %arg9[%c0_74, %c0_75], %222 {strides = array<i32>} : memref<16x32xf32, #tpu.memory_space<vmem>>, vector<16x32xf32>,
    } else {
    }
    return
  }
  func.func @transform_0(%arg0: i32) -> (i32, i32) {
    %c0_i32 = arith.constant 0 : i32
    %c0_i32_0 = arith.constant 0 : i32
    %c0_i32_1 = arith.constant 0 : i32
    return %c0_i32, %c0_i32_0 : i32, i32
  }
  func.func @transform_1(%arg0: i32) -> (i32, i32, i32) {
    %c0_i32 = arith.constant 0 : i32
    %c0_i32_0 = arith.constant 0 : i32
    %c0_i32_1 = arith.constant 0 : i32
    return %arg0, %c0_i32, %c0_i32_0 : i32, i32, i32
  }
  func.func @transform_2(%arg0: i32) -> (i32, i32, i32) {
    %c0_i32 = arith.constant 0 : i32
    %c0_i32_0 = arith.constant 0 : i32
    %c0_i32_1 = arith.constant 0 : i32
    return %arg0, %c0_i32, %c0_i32_0 : i32, i32, i32
  }
  func.func @transform_3(%arg0: i32) -> (i32, i32, i32) {
    %c0_i32 = arith.constant 0 : i32
    %c0_i32_0 = arith.constant 0 : i32
    %c0_i32_1 = arith.constant 0 : i32
    return %arg0, %c0_i32, %c0_i32_0 : i32, i32, i32
  }
  func.func @transform_4(%arg0: i32) -> (i32, i32, i32) {
    %c0_i32 = arith.constant 0 : i32
    %c0_i32_0 = arith.constant 0 : i32
    %c0_i32_1 = arith.constant 0 : i32
    return %arg0, %c0_i32, %c0_i32_0 : i32, i32, i32
  }
  func.func @transform_5(%arg0: i32) -> (i32, i32, i32) {
    %c0_i32 = arith.constant 0 : i32
    %c0_i32_0 = arith.constant 0 : i32
    %c0_i32_1 = arith.constant 0 : i32
    return %arg0, %c0_i32, %c0_i32_0 : i32, i32, i32
  }
  func.func @transform_6(%arg0: i32) -> (i32, i32, i32) {
    %c0_i32 = arith.constant 0 : i32
    %c0_i32_0 = arith.constant 0 : i32
    %c0_i32_1 = arith.constant 0 : i32
    return %arg0, %c0_i32, %c0_i32_0 : i32, i32, i32
  }
  func.func @transform_7(%arg0: i32) -> (i32, i32, i32) {
    %c0_i32 = arith.constant 0 : i32
    %c0_i32_0 = arith.constant 0 : i32
    %c0_i32_1 = arith.constant 0 : i32
    return %arg0, %c0_i32, %c0_i32_0 : i32, i32, i32
  }
  func.func @transform_8(%arg0: i32) -> (i32, i32) {
    %c0_i32 = arith.constant 0 : i32
    %c0_i32_0 = arith.constant 0 : i32
    %c0_i32_1 = arith.constant 0 : i32
    return %c0_i32, %c0_i32_0 : i32, i32
  }
}

</mosaic_0001>

<llo_original>
// kernel: tpu_custom_call.1
$region0: #{tpu_custom_call.1}
  #allocation0 [shape = 'u32[]', space=smem, size = 0x4, offset = 0x4, fixed_abs, tag = 'smem constant byte address 0x4 - core index']
  #allocation1 [shape = 'u32[72,128]{1,0:T(1,128)}', space=vmem, size = 0x9000, scoped, tag = 'internal scratch']
  #allocation2 [shape = 'f32[16,32]{1,0:T(8,128)}', space=vmem, size = 0x2000, scoped, tag = 'scratch operand']
  %s0 = inlined_call_operand.hbm [shape: f32[16,32], index: 0, kind: input, shape index: {}]
  %s1 = inlined_call_operand.vmem [shape: bf16[2,32,96], index: 1, kind: input, shape index: {}]
  %s2 = inlined_call_operand.hbm [shape: f32[2,1,96], index: 2, kind: input, shape index: {}]
  %s3 = inlined_call_operand.vmem [shape: bf16[2,32,32], index: 3, kind: input, shape index: {}]
  %s4 = inlined_call_operand.vmem [shape: bf16[2,32,64], index: 4, kind: input, shape index: {}]
  %s5 = inlined_call_operand.hbm [shape: f32[2,1,64], index: 5, kind: input, shape index: {}]
  %s6 = inlined_call_operand.vmem [shape: bf16[2,64,32], index: 6, kind: input, shape index: {}]
  %s7 = inlined_call_operand.vmem [shape: f32[2,6,32], index: 7, kind: input, shape index: {}]
  %s8 = inlined_call_operand.hbm [shape: f32[16,32], index: 8, kind: output, shape index: {}]
  %s9 = sld [smem:[#allocation0]]
  $region85: #{tpu_custom_call.1} parent=0
    _
  %s11 = ssub.s32 1, %s9
  %s12 = scalar_select 0, %s11, %s9
  $region1: #{tpu_custom_call.1} parent=0
    #allocation3 [shape = 'u8[8192]{0}', space=vmem, size = 0x2000, scoped, tag = 'input window, operand 0, single buffered']
    #allocation4 [shape = 's32[2]{0}', space=sflag, size = 0x8, scoped, tag = 'scoped memory for tpu_custom_call.1']
    #allocation5 [shape = 's32[2]{0}', space=sflag, size = 0x8, scoped, tag = 'scoped memory for tpu_custom_call.1']
    #allocation6 [shape = 'u8[1024]{0}', space=vmem, size = 0x400, scoped, tag = 'input window, operand 2']
    #allocation7 [shape = 's32[2]{0}', space=sflag, size = 0x8, scoped, tag = 'scoped memory for tpu_custom_call.1']
    #allocation8 [shape = 'u8[1024]{0}', space=vmem, size = 0x400, scoped, tag = 'input window, operand 5']
    #allocation9 [shape = 'u8[8192]{0}', space=vmem, size = 0x2000, scoped, tag = 'output window, operand 0, single buffered']
    %13 = vsyncpa [#allocation4], 0
    %14 = vsyncpa [#allocation7], 0
    %s15 = scalar_lea.sflag [#allocation7], 1
    %16 = vsyncpa %s15, 0
    %17 = vsyncpa [#allocation5], 0
    loop: start=0, step=1, limit=4
    $region2: #{tpu_custom_call.1} parent=1 // loop_pre_header
      _
    $region3: #{tpu_custom_call.1} parent=1 // loop_header
      %s19 = sphi 0, %s23
      %p20 = scmp.ge.s32.totalorder %s19, 4
      %s27 = sphi 0, %s27
      %s29 = sphi 0, %s27
      %s30 = sphi 0, %s29
      %s44 = sphi 0, %s30
      %s50 = sphi 0, %s52
      %s53 = sphi 0, %s50
      %s54 = sphi 0, %s53
      %s70 = sphi 0, %s54
      %s76 = sphi 0, %s78
      %s79 = sphi 0, %s76
      %s80 = sphi 0, %s79
      %s96 = sphi 0, %s80
      %s102 = sphi 0, %s104
      %s105 = sphi 0, %s102
      %s106 = sphi 0, %s105
      %s122 = sphi 0, %s106
      %s128 = sphi 0, %s130
      %s131 = sphi 0, %s128
      %s132 = sphi 0, %s131
      %s148 = sphi 0, %s132
      %s154 = sphi 0, %s156
      %s157 = sphi 0, %s154
      %s158 = sphi 0, %s157
      %s174 = sphi 0, %s158
      %s180 = sphi 0, %s182
      %s183 = sphi 0, %s180
      %s184 = sphi 0, %s183
      %s200 = sphi 0, %s184
      %s206 = sphi 0, %s208
      %s209 = sphi 0, %s206
      %s210 = sphi 0, %s209
      %s226 = sphi 0, %s210
      %s230 = sphi 0, %s230
      %s232 = sphi 0, %s230
      %s233 = sphi 0, %s232
      %s247 = sphi 0, %s233
    $region4: #{tpu_custom_call.1} parent=1 // loop_header_branch
      %22 = sbr.rel (%p20) target = $region8
    $region5: #{tpu_custom_call.1} parent=1 // loop_body
      %s24 = ssub.s32 %s19, 1
      %s25 = ssub.s32 %s19, 2
      %s26 = sadd.s32 %s19, 1
      %s28 = sadd.s32 %s27, 1
      %p31 = scmp.eq.s32.totalorder %s19, 1
      %p32 = scmp.ne.s32.totalorder %s27, %s29
      %p33 = scmp.eq.s32.totalorder %s19, 0
      %p34 = por %p32, %p33
      %p35 = scmp.ne.s32.totalorder %s27, %s29
      %p36 = scmp.eq.s32.totalorder %s24, 1
      %p37 = por %p35, %p36
      %p38 = scmp.ne.s32.totalorder %s29, %s30
      %p39 = scmp.eq.s32.totalorder %s24, 0
      %p40 = por %p38, %p39
      %p41 = scmp.ne.s32.totalorder %s29, %s30
      %p42 = scmp.eq.s32.totalorder %s25, 1
      %p43 = por %p41, %p42
      %p45 = scmp.ne.s32.totalorder %s30, %s44
      %p46 = scmp.eq.s32.totalorder %s25, 0
      %p47 = por %p45, %p46
      %s48 = ssub.s32 %s19, %s26
      %p49 = scmp.eq.s32.totalorder %s48, 0
      %s51 = sadd.s32 %s50, 1
      %s52 = scalar_select %p49, %s50, %s51
      %p55 = pneg %p49
      %p56 = scmp.eq.s32.totalorder %s19, 1
      %p57 = por %p55, %p56
      %p58 = scmp.ne.s32.totalorder %s50, %s53
      %p59 = scmp.eq.s32.totalorder %s19, 0
      %p60 = por %p58, %p59
      %p61 = scmp.ne.s32.totalorder %s50, %s53
      %p62 = scmp.eq.s32.totalorder %s24, 1
      %p63 = por %p61, %p62
      %p64 = scmp.ne.s32.totalorder %s53, %s54
      %p65 = scmp.eq.s32.totalorder %s24, 0
      %p66 = por %p64, %p65
      %p67 = scmp.ne.s32.totalorder %s53, %s54
      %p68 = scmp.eq.s32.totalorder %s25, 1
      %p69 = por %p67, %p68
      %p71 = scmp.ne.s32.totalorder %s54, %s70
      %p72 = scmp.eq.s32.totalorder %s25, 0
      %p73 = por %p71, %p72
      %s74 = ssub.s32 %s19, %s26
      %p75 = scmp.eq.s32.totalorder %s74, 0
      %s77 = sadd.s32 %s76, 1
      %s78 = scalar_select %p75, %s76, %s77
      %p81 = pneg %p75
      %p82 = scmp.eq.s32.totalorder %s19, 1
      %p83 = por %p81, %p82
      %p84 = scmp.ne.s32.totalorder %s76, %s79
      %p85 = scmp.eq.s32.totalorder %s19, 0
      %p86 = por %p84, %p85
      %p87 = scmp.ne.s32.totalorder %s76, %s79
      %p88 = scmp.eq.s32.totalorder %s24, 1
      %p89 = por %p87, %p88
      %p90 = scmp.ne.s32.totalorder %s79, %s80
      %p91 = scmp.eq.s32.totalorder %s24, 0
      %p92 = por %p90, %p91
      %p93 = scmp.ne.s32.totalorder %s79, %s80
      %p94 = scmp.eq.s32.totalorder %s25, 1
      %p95 = por %p93, %p94
      %p97 = scmp.ne.s32.totalorder %s80, %s96
      %p98 = scmp.eq.s32.totalorder %s25, 0
      %p99 = por %p97, %p98
      %s100 = ssub.s32 %s19, %s26
      %p101 = scmp.eq.s32.totalorder %s100, 0
      %s103 = sadd.s32 %s102, 1
      %s104 = scalar_select %p101, %s102, %s103
      %p107 = pneg %p101
      %p108 = scmp.eq.s32.totalorder %s19, 1
      %p109 = por %p107, %p108
      %p110 = scmp.ne.s32.totalorder %s102, %s105
      %p111 = scmp.eq.s32.totalorder %s19, 0
      %p112 = por %p110, %p111
      %p113 = scmp.ne.s32.totalorder %s102, %s105
      %p114 = scmp.eq.s32.totalorder %s24, 1
      %p115 = por %p113, %p114
      %p116 = scmp.ne.s32.totalorder %s105, %s106
      %p117 = scmp.eq.s32.totalorder %s24, 0
      %p118 = por %p116, %p117
      %p119 = scmp.ne.s32.totalorder %s105, %s106
      %p120 = scmp.eq.s32.totalorder %s25, 1
      %p121 = por %p119, %p120
      %p123 = scmp.ne.s32.totalorder %s106, %s122
      %p124 = scmp.eq.s32.totalorder %s25, 0
      %p125 = por %p123, %p124
      %s126 = ssub.s32 %s19, %s26
      %p127 = scmp.eq.s32.totalorder %s126, 0
      %s129 = sadd.s32 %s128, 1
      %s130 = scalar_select %p127, %s128, %s129
      %p133 = pneg %p127
      %p134 = scmp.eq.s32.totalorder %s19, 1
      %p135 = por %p133, %p134
      %p136 = scmp.ne.s32.totalorder %s128, %s131
      %p137 = scmp.eq.s32.totalorder %s19, 0
      %p138 = por %p136, %p137
      %p139 = scmp.ne.s32.totalorder %s128, %s131
      %p140 = scmp.eq.s32.totalorder %s24, 1
      %p141 = por %p139, %p140
      %p142 = scmp.ne.s32.totalorder %s131, %s132
      %p143 = scmp.eq.s32.totalorder %s24, 0
      %p144 = por %p142, %p143
      %p145 = scmp.ne.s32.totalorder %s131, %s132
      %p146 = scmp.eq.s32.totalorder %s25, 1
      %p147 = por %p145, %p146
      %p149 = scmp.ne.s32.totalorder %s132, %s148
      %p150 = scmp.eq.s32.totalorder %s25, 0
      %p151 = por %p149, %p150
      %s152 = ssub.s32 %s19, %s26
      %p153 = scmp.eq.s32.totalorder %s152, 0
      %s155 = sadd.s32 %s154, 1
      %s156 = scalar_select %p153, %s154, %s155
      %p159 = pneg %p153
      %p160 = scmp.eq.s32.totalorder %s19, 1
      %p161 = por %p159, %p160
      %p162 = scmp.ne.s32.totalorder %s154, %s157
      %p163 = scmp.eq.s32.totalorder %s19, 0
      %p164 = por %p162, %p163
      %p165 = scmp.ne.s32.totalorder %s154, %s157
      %p166 = scmp.eq.s32.totalorder %s24, 1
      %p167 = por %p165, %p166
      %p168 = scmp.ne.s32.totalorder %s157, %s158
      %p169 = scmp.eq.s32.totalorder %s24, 0
      %p170 = por %p168, %p169
      %p171 = scmp.ne.s32.totalorder %s157, %s158
      %p172 = scmp.eq.s32.totalorder %s25, 1
      %p173 = por %p171, %p172
      %p175 = scmp.ne.s32.totalorder %s158, %s174
      %p176 = scmp.eq.s32.totalorder %s25, 0
      %p177 = por %p175, %p176
      %s178 = ssub.s32 %s19, %s26
      %p179 = scmp.eq.s32.totalorder %s178, 0
      %s181 = sadd.s32 %s180, 1
      %s182 = scalar_select %p179, %s180, %s181
      %p185 = pneg %p179
      %p186 = scmp.eq.s32.totalorder %s19, 1
      %p187 = por %p185, %p186
      %p188 = scmp.ne.s32.totalorder %s180, %s183
      %p189 = scmp.eq.s32.totalorder %s19, 0
      %p190 = por %p188, %p189
      %p191 = scmp.ne.s32.totalorder %s180, %s183
      %p192 = scmp.eq.s32.totalorder %s24, 1
      %p193 = por %p191, %p192
      %p194 = scmp.ne.s32.totalorder %s183, %s184
      %p195 = scmp.eq.s32.totalorder %s24, 0
      %p196 = por %p194, %p195
      %p197 = scmp.ne.s32.totalorder %s183, %s184
      %p198 = scmp.eq.s32.totalorder %s25, 1
      %p199 = por %p197, %p198
      %p201 = scmp.ne.s32.totalorder %s184, %s200
      %p202 = scmp.eq.s32.totalorder %s25, 0
      %p203 = por %p201, %p202
      %s204 = ssub.s32 %s19, %s26
      %p205 = scmp.eq.s32.totalorder %s204, 0
      %s207 = sadd.s32 %s206, 1
      %s208 = scalar_select %p205, %s206, %s207
      %p211 = pneg %p205
      %p212 = scmp.eq.s32.totalorder %s19, 1
      %p213 = por %p211, %p212
      %p214 = scmp.ne.s32.totalorder %s206, %s209
      %p215 = scmp.eq.s32.totalorder %s19, 0
      %p216 = por %p214, %p215
      %p217 = scmp.ne.s32.totalorder %s206, %s209
      %p218 = scmp.eq.s32.totalorder %s24, 1
      %p219 = por %p217, %p218
      %p220 = scmp.ne.s32.totalorder %s209, %s210
      %p221 = scmp.eq.s32.totalorder %s24, 0
      %p222 = por %p220, %p221
      %p223 = scmp.ne.s32.totalorder %s209, %s210
      %p224 = scmp.eq.s32.totalorder %s25, 1
      %p225 = por %p223, %p224
      %p227 = scmp.ne.s32.totalorder %s210, %s226
      %p228 = scmp.eq.s32.totalorder %s25, 0
      %p229 = por %p227, %p228
      %s231 = sadd.s32 %s230, 1
      %p234 = scmp.eq.s32.totalorder %s19, 1
      %p235 = scmp.ne.s32.totalorder %s230, %s232
      %p236 = scmp.eq.s32.totalorder %s19, 0
      %p237 = por %p235, %p236
      %p238 = scmp.ne.s32.totalorder %s230, %s232
      %p239 = scmp.eq.s32.totalorder %s24, 1
      %p240 = por %p238, %p239
      %p241 = scmp.ne.s32.totalorder %s232, %s233
      %p242 = scmp.eq.s32.totalorder %s24, 0
      %p243 = por %p241, %p242
      %p244 = scmp.ne.s32.totalorder %s232, %s233
      %p245 = scmp.eq.s32.totalorder %s25, 1
      %p246 = por %p244, %p245
      %p248 = scmp.ne.s32.totalorder %s233, %s247
      %p249 = scmp.eq.s32.totalorder %s25, 0
      %p250 = por %p248, %p249
      %p251 = scmp.le.s32.totalorder 1, %s19
      %p252 = scmp.lt.s32.totalorder %s19, 3
      %p253 = pnand %p251, %p252
      %p254 = pneg %p253
      // Predicated region
      $region9: #{tpu_custom_call.1} parent=5 // pred_check
        _
      $region10: #{tpu_custom_call.1} parent=5 // pred_check_branch
        %256 = sbr.rel (%p253) target = $region12
      $region11: #{tpu_custom_call.1} parent=5 // pred_region
        %s257 = ssub.s32 %s19, 1
        // Predicated region
        $region13: #{tpu_custom_call.1} parent=11 // pred_check
          %p258 = pneg %p40
        $region14: #{tpu_custom_call.1} parent=11 // pred_check_branch
          %260 = sbr.rel (%p258) target = $region16
        $region15: #{tpu_custom_call.1} parent=11 // pred_region
          %262 = vsyncadd [#allocation4], 0
          %s263 = sshll.u32 %s0, 4
          %s264 = int_to_ptr.hbm [resolvable:$true] %s263
          %s265 = sshll.u32 [#allocation3], 4
          %s266 = int_to_ptr.vmem [resolvable:$true] %s265
          %271 = dma.hbm_to_vmem [thread:$0]  %s264, 256, %s266, [#allocation4], 128, 128, 8
        $region16: #{tpu_custom_call.1} parent=11 // pred_fallthru
          _
      $region12: #{tpu_custom_call.1} parent=5 // pred_fallthru
        _
      %p272 = scmp.lt.s32.totalorder %s19, 2
      // Predicated region
      $region17: #{tpu_custom_call.1} parent=5 // pred_check
        %p273 = pneg %p272
      $region18: #{tpu_custom_call.1} parent=5 // pred_check_branch
        %275 = sbr.rel (%p273) target = $region20
      $region19: #{tpu_custom_call.1} parent=5 // pred_region
        // Predicated region
        $region21: #{tpu_custom_call.1} parent=19 // pred_check
          %p276 = pneg %p60
        $region22: #{tpu_custom_call.1} parent=19 // pred_check_branch
          %278 = sbr.rel (%p276) target = $region24
        $region23: #{tpu_custom_call.1} parent=19 // pred_region
          %p279 = scmp.lt.s32.totalorder %s19, 1
          %s280 = scalar_select %p279, %s19, 1
          %s281 = smul.addr %s280, 4
          %s282 = smul.addr %s281, 4
          %s283 = scalar_lea.vmem %s1, %s282
        $region24: #{tpu_custom_call.1} parent=19 // pred_fallthru
          _
        // Predicated region
        $region25: #{tpu_custom_call.1} parent=19 // pred_check
          %p284 = pneg %p86
        $region26: #{tpu_custom_call.1} parent=19 // pred_check_branch
          %286 = sbr.rel (%p284) target = $region28
        $region27: #{tpu_custom_call.1} parent=19 // pred_region
          %s287 = sand.u32 %s19, 1
          %s288 = scalar_lea.sflag [#allocation7], %s287
          %s289 = sand.u32 %s76, 1
          %s290 = scalar_lea.vmem [#allocation6], %s289
          %292 = vsyncadd %s288, 0
          %s293 = scalar_lea.hbm %s2, %s19
          %s295 = sshll.u32 %s293, 4
          %s296 = int_to_ptr.hbm [resolvable:$true] %s295
          %s297 = sshll.u32 %s290, 4
          %s298 = int_to_ptr.vmem [resolvable:$true] %s297
          %300 = dma.hbm_to_vmem [thread:$0]  %s296, 16, %s298, %s288
        $region28: #{tpu_custom_call.1} parent=19 // pred_fallthru
          _
        // Predicated region
        $region29: #{tpu_custom_call.1} parent=19 // pred_check
          %p301 = pneg %p112
        $region30: #{tpu_custom_call.1} parent=19 // pred_check_branch
          %303 = sbr.rel (%p301) target = $region32
        $region31: #{tpu_custom_call.1} parent=19 // pred_region
          %p304 = scmp.lt.s32.totalorder %s19, 1
          %s305 = scalar_select %p304, %s19, 1
          %s306 = smul.addr %s305, 4
          %s307 = smul.addr %s306, 4
          %s308 = scalar_lea.vmem %s3, %s307
        $region32: #{tpu_custom_call.1} parent=19 // pred_fallthru
          _
        // Predicated region
        $region33: #{tpu_custom_call.1} parent=19 // pred_check
          %p309 = pneg %p138
        $region34: #{tpu_custom_call.1} parent=19 // pred_check_branch
          %311 = sbr.rel (%p309) target = $region36
        $region35: #{tpu_custom_call.1} parent=19 // pred_region
          %p312 = scmp.lt.s32.totalorder %s19, 1
          %s313 = scalar_select %p312, %s19, 1
          %s314 = smul.addr %s313, 4
          %s315 = smul.addr %s314, 4
          %s316 = scalar_lea.vmem %s4, %s315
        $region36: #{tpu_custom_call.1} parent=19 // pred_fallthru
          _
        // Predicated region
        $region37: #{tpu_custom_call.1} parent=19 // pred_check
          %p317 = pneg %p164
        $region38: #{tpu_custom_call.1} parent=19 // pred_check_branch
          %319 = sbr.rel (%p317) target = $region40
        $region39: #{tpu_custom_call.1} parent=19 // pred_region
          %s320 = sand.u32 %s19, 1
          %s321 = scalar_lea.sflag [#allocation7], %s320
          %s322 = sand.u32 %s154, 1
          %s323 = scalar_lea.vmem [#allocation8], %s322
          %325 = vsyncadd %s321, 0
          %s326 = scalar_lea.hbm %s5, %s19
          %s328 = sshll.u32 %s326, 4
          %s329 = int_to_ptr.hbm [resolvable:$true] %s328
          %s330 = sshll.u32 %s323, 4
          %s331 = int_to_ptr.vmem [resolvable:$true] %s330
          %333 = dma.hbm_to_vmem [thread:$0]  %s329, 16, %s331, %s321
        $region40: #{tpu_custom_call.1} parent=19 // pred_fallthru
          _
        // Predicated region
        $region41: #{tpu_custom_call.1} parent=19 // pred_check
          %p334 = pneg %p190
        $region42: #{tpu_custom_call.1} parent=19 // pred_check_branch
          %336 = sbr.rel (%p334) target = $region44
        $region43: #{tpu_custom_call.1} parent=19 // pred_region
          %p337 = scmp.lt.s32.totalorder %s19, 1
          %s338 = scalar_select %p337, %s19, 1
          %s339 = smul.addr %s338, 8
          %s340 = smul.addr %s339, 4
          %s341 = scalar_lea.vmem %s6, %s340
        $region44: #{tpu_custom_call.1} parent=19 // pred_fallthru
          _
        // Predicated region
        $region45: #{tpu_custom_call.1} parent=19 // pred_check
          %p342 = pneg %p216
        $region46: #{tpu_custom_call.1} parent=19 // pred_check_branch
          %344 = sbr.rel (%p342) target = $region48
        $region47: #{tpu_custom_call.1} parent=19 // pred_region
          %p345 = scmp.lt.s32.totalorder %s19, 1
          %s346 = scalar_select %p345, %s19, 1
          %s347 = smul.addr %s346, 8
          %s348 = scalar_lea.vmem %s7, %s347
        $region48: #{tpu_custom_call.1} parent=19 // pred_fallthru
          _
      $region20: #{tpu_custom_call.1} parent=5 // pred_fallthru
        _
      %p349 = scmp.le.s32.totalorder 1, %s19
      %p350 = scmp.lt.s32.totalorder %s19, 3
      %p351 = pnand %p349, %p350
      %p352 = pneg %p351
      // Predicated region
      $region49: #{tpu_custom_call.1} parent=5 // pred_check
        _
      $region50: #{tpu_custom_call.1} parent=5 // pred_check_branch
        %354 = sbr.rel (%p351) target = $region52
      $region51: #{tpu_custom_call.1} parent=5 // pred_region
        %s355 = ssub.s32 %s19, 1
        // Predicated region
        $region53: #{tpu_custom_call.1} parent=51 // pred_check
          %p356 = pneg %p40
        $region54: #{tpu_custom_call.1} parent=51 // pred_check_branch
          %358 = sbr.rel (%p356) target = $region56
        $region55: #{tpu_custom_call.1} parent=51 // pred_region
          %360 = dma.done [#allocation4], 256
        $region56: #{tpu_custom_call.1} parent=51 // pred_fallthru
          _
        %s361 = sand.u32 %s24, 1
        %s362 = scalar_lea.sflag [#allocation7], %s361
        %s363 = sand.u32 %s79, 1
        %s364 = scalar_lea.vmem [#allocation6], %s363
        // Predicated region
        $region57: #{tpu_custom_call.1} parent=51 // pred_check
          %p365 = pneg %p92
        $region58: #{tpu_custom_call.1} parent=51 // pred_check_branch
          %367 = sbr.rel (%p365) target = $region60
        $region59: #{tpu_custom_call.1} parent=51 // pred_region
          %369 = dma.done %s362, 16
        $region60: #{tpu_custom_call.1} parent=51 // pred_fallthru
          _
        %s370 = sand.u32 %s24, 1
        %s371 = scalar_lea.sflag [#allocation7], %s370
        %s372 = sand.u32 %s157, 1
        %s373 = scalar_lea.vmem [#allocation8], %s372
        // Predicated region
        $region61: #{tpu_custom_call.1} parent=51 // pred_check
          %p374 = pneg %p170
        $region62: #{tpu_custom_call.1} parent=51 // pred_check_branch
          %376 = sbr.rel (%p374) target = $region64
        $region63: #{tpu_custom_call.1} parent=51 // pred_region
          %378 = dma.done %s371, 16
        $region64: #{tpu_custom_call.1} parent=51 // pred_fallthru
          _
        %p379 = pneg %p40
        %p380 = pneg %p37
        %p381 = scmp.lt.s32.totalorder %s24, 1
        %s382 = scalar_select %p381, %s24, 1
        %s383 = smul.addr %s382, 4
        %s384 = smul.addr %s383, 4
        %s385 = scalar_lea.vmem %s1, %s384
        %p386 = pneg %p66
        %p387 = pneg %p63
        %s388 = sand.u32 %s24, 1
        %s389 = scalar_lea.sflag [#allocation7], %s388
        %s390 = sand.u32 %s79, 1
        %s391 = scalar_lea.vmem [#allocation6], %s390
        %p392 = pneg %p92
        %p393 = pneg %p89
        %p394 = scmp.lt.s32.totalorder %s24, 1
        %s395 = scalar_select %p394, %s24, 1
        %s396 = smul.addr %s395, 4
        %s397 = smul.addr %s396, 4
        %s398 = scalar_lea.vmem %s3, %s397
        %p399 = pneg %p118
        %p400 = pneg %p115
        %p401 = scmp.lt.s32.totalorder %s24, 1
        %s402 = scalar_select %p401, %s24, 1
        %s403 = smul.addr %s402, 4
        %s404 = smul.addr %s403, 4
        %s405 = scalar_lea.vmem %s4, %s404
        %p406 = pneg %p144
        %p407 = pneg %p141
        %s408 = sand.u32 %s24, 1
        %s409 = scalar_lea.sflag [#allocation7], %s408
        %s410 = sand.u32 %s157, 1
        %s411 = scalar_lea.vmem [#allocation8], %s410
        %p412 = pneg %p170
        %p413 = pneg %p167
        %p414 = scmp.lt.s32.totalorder %s24, 1
        %s415 = scalar_select %p414, %s24, 1
        %s416 = smul.addr %s415, 8
        %s417 = smul.addr %s416, 4
        %s418 = scalar_lea.vmem %s6, %s417
        %p419 = pneg %p196
        %p420 = pneg %p193
        %p421 = scmp.lt.s32.totalorder %s24, 1
        %s422 = scalar_select %p421, %s24, 1
        %s423 = smul.addr %s422, 8
        %s424 = scalar_lea.vmem %s7, %s423
        %p425 = pneg %p222
        %p426 = pneg %p219
        %p427 = pneg %p243
        %p428 = pneg %p240
        %p429 = scmp.lt.s32.totalorder %s24, 1
        %s430 = scalar_select %p429, %s24, 1
        %s431 = smul.addr %s430, 4
        %s432 = smul.addr %s431, 4
        %s433 = scalar_lea.vmem %s1, %s432
        %p434 = scmp.lt.s32.totalorder %s24, 1
        %s435 = scalar_select %p434, %s24, 1
        %s436 = smul.addr %s435, 4
        %s437 = smul.addr %s436, 4
        %s438 = scalar_lea.vmem %s3, %s437
        %p439 = scmp.lt.s32.totalorder %s24, 1
        %s440 = scalar_select %p439, %s24, 1
        %s441 = smul.addr %s440, 4
        %s442 = smul.addr %s441, 4
        %s443 = scalar_lea.vmem %s4, %s442
        %p444 = scmp.lt.s32.totalorder %s24, 1
        %s445 = scalar_select %p444, %s24, 1
        %s446 = smul.addr %s445, 8
        %s447 = smul.addr %s446, 4
        %s448 = scalar_lea.vmem %s6, %s447
        %p449 = scmp.lt.s32.totalorder %s24, 1
        %s450 = scalar_select %p449, %s24, 1
        %s451 = smul.addr %s450, 8
        %s452 = scalar_lea.vmem %s7, %s451
        %p454 = scmp.eq.s32.totalorder %s24, 0
        // Predicated region
        $region65: #{tpu_custom_call.1} parent=51 // pred_check
          %p455 = pneg %p454
        $region66: #{tpu_custom_call.1} parent=51 // pred_check_branch
          %457 = sbr.rel (%p455) target = $region68
        $region67: #{tpu_custom_call.1} parent=51 // pred_region
          %v458 = vld [vmem:[#allocation3] sm:$0xff]
          %v459 = vld [vmem:[#allocation3 + $0x8] sm:$0xff]
          %vm460 = vcmask 261120
          %461 = vst.msk [vmem:[#allocation2] sm:$0xff] %vm460, %v458
          %462 = vst.msk [vmem:[#allocation2 + $0x8] sm:$0xff] %vm460, %v459
        $region68: #{tpu_custom_call.1} parent=51 // pred_fallthru
          _
        %v463 = vld [vmem:[#allocation2] sm:$0xff]
        %v464 = vld [vmem:[#allocation2 + $0x8] sm:$0xff]
        %v465 = vld [vmem:[%s452] sm:$0x3f]
        %v466 = vpack.c.bf16 %v464, %v463
        %v467 = vld [vmem:[%s433] sm:$0xf]
        %v468 = vld [vmem:[%s433 + $0x4] sm:$0xf]
        %v469 = vld [vmem:[%s433 + $0x8] sm:$0xf]
        %v470 = vld [vmem:[%s433 + $0xc] sm:$0xf]
        %v471 = vld [vmem:[%s364] sm:$0x1]
        %v473 = vperm.slane %v471, 0
        %v479 = vunpack.c.l.b16 %v467
        %v480 = vunpack.c.l.b16 %v468
        %v481 = vunpack.c.l.b16 %v469
        %v482 = vunpack.c.l.b16 %v470
        %v483 = vpack.c.b16 %v480, %v479
        %v484 = vpack.c.b16 %v482, %v481
        %vm487 = vcmask 261120
        %v489 = vsel %vm487, %v466, 0
        %491 = vmatpush.bf16.msra.mxu0 0
        %492 = vmatpush.bf16.msra.mxu0 0
        %493 = vmatpush.bf16.msra.mxu0 0
        %494 = vmatpush.bf16.msra.mxu0 0
        %495 = vmatpush.bf16.msra.mxu0 0
        %496 = vmatpush.bf16.msra.mxu0 0
        %497 = vmatpush.bf16.msra.mxu0 %v484
        %498 = vmatpush.bf16.msra.mxu0 %v483
        %499 = vmatmul.bf16.gmra.mxu0 %v489
        %v500 = vpop.f32.mrf.mxu0
        %v501 = vadd.f32 %v473, %v500
        %v502 = vpop.f32.mrf.mxu0
        %v503 = vadd.f32 %v473, %v502
        %504 = vdwg.mxu0
        %v505 = vmul.f32 %v501, 0.35355338
        %v506 = vmul.f32 %v503, 0.35355338
        %v507 = vpack.c.bf16 %v505, %v505
        %v508 = vpack.c.bf16 %v506, %v506
        %v509 = vpack.c.bf16 %v501, %v501
        %v510 = vpack.c.bf16 %v503, %v503
        %v512 = vunpack.c.l.b16 %v509
        %v513 = vpack.c.b16 %v512, %v512
        %514 = vrot.lane.b32.xlu0 %v513, 96
        %v515 = vpop.permute.xlu0 %514
        %vm516 = vcmask 64512
        %v518 = vsel %vm516, %v507, 0
        %v521 = vsel %vm516, %v515, 0
        %523 = vmatpush.bf16.xpose.msra.mxu0 0
        %524 = vmatpush.bf16.xpose.msra.mxu0 0
        %525 = vmatpush.bf16.xpose.msra.mxu0 0
        %526 = vmatpush.bf16.xpose.msra.mxu0 0
        %527 = vmatpush.bf16.xpose.msra.mxu0 0
        %528 = vmatpush.bf16.xpose.msra.mxu0 0
        %529 = vmatpush.bf16.xpose.msra.mxu0 0
        %530 = vmatpush.bf16.xpose.msra.mxu0 %v521
        %531 = vmatmul.bf16.gmra.mxu0 %v518
        %v532 = vpop.f32.mrf.mxu0
        %v533 = vadd.f32 0.0, %v532
        %v534 = vpop.f32.mrf.mxu0
        %535 = vdwg.mxu0
        %v537 = vunpack.c.l.b16 %v510
        %v538 = vpack.c.b16 %v537, %v537
        %539 = vrot.lane.b32.xlu0 %v538, 96
        %v540 = vpop.permute.xlu0 %539
        %v542 = vsel %vm516, %v508, 0
        %v545 = vsel %vm516, %v540, 0
        %547 = vmatpush.bf16.xpose.msra.mxu0 0
        %548 = vmatpush.bf16.xpose.msra.mxu0 0
        %549 = vmatpush.bf16.xpose.msra.mxu0 0
        %550 = vmatpush.bf16.xpose.msra.mxu0 0
        %551 = vmatpush.bf16.xpose.msra.mxu0 0
        %552 = vmatpush.bf16.xpose.msra.mxu0 0
        %553 = vmatpush.bf16.xpose.msra.mxu0 0
        %554 = vmatpush.bf16.xpose.msra.mxu0 %v545
        %555 = vmatmul.bf16.gmra.mxu0 %v542
        %v556 = vpop.f32.mrf.mxu0
        %v557 = vadd.f32 0.0, %v556
        %v558 = vpop.f32.mrf.mxu0
        %559 = vdwg.mxu0
        %v560 = vsel %vm516, %v533, -inf
        %561 = vmax.xlane.f32.xlu0 %v560
        %v562 = vpop.xlane.xlu0 %561
        %v563 = vsel %vm516, %v557, -inf
        %564 = vmax.xlane.f32.xlu0 %v563
        %v565 = vpop.xlane.xlu0 %564
        %v566 = vsub.f32 %v533, %v562
        %v567 = vsub.f32 %v557, %v565
        %v568 = vmul.f32 %v566, 1.442695
        %v569 = vpow.pop %v568
        %v570 = vmul.f32 %v567, 1.442695
        %v571 = vpow.pop %v570
        %v572 = vsel %vm516, %v569, 0.0
        %573 = vadd.xlane.f32.xlu0 %v572
        %v574 = vpop.xlane.xlu0 %573
        %v575 = vsel %vm516, %v571, 0.0
        %576 = vadd.xlane.f32.xlu0 %v575
        %v577 = vpop.xlane.xlu0 %576
        %v578 = vrcp.pop %v574
        %v579 = vrcp.pop %v577
        %v580 = vmul.f32 %v569, %v578
        %v581 = vmul.f32 %v571, %v579
        %v582 = vpack.c.bf16 %v580, %v580
        %v583 = vpack.c.bf16 %v581, %v581
        %584 = vrot.lane.b32.xlu0 %v513, 64
        %v585 = vpop.permute.xlu0 %584
        %v587 = vsel %vm516, %v582, 0
        %vm589 = vcmask 1043456
        %v591 = vsel %vm589, %v585, 0
        %593 = vmatpush.bf16.msra.mxu0 0
        %594 = vmatpush.bf16.msra.mxu0 0
        %595 = vmatpush.bf16.msra.mxu0 0
        %596 = vmatpush.bf16.msra.mxu0 0
        %597 = vmatpush.bf16.msra.mxu0 0
        %598 = vmatpush.bf16.msra.mxu0 0
        %599 = vmatpush.bf16.msra.mxu0 0
        %600 = vmatpush.bf16.msra.mxu0 %v591
        %601 = vmatmul.bf16.gmra.mxu0 %v587
        %v602 = vpop.f32.mrf.mxu0
        %v603 = vadd.f32 0.0, %v602
        %v604 = vpop.f32.mrf.mxu0
        %605 = vdwg.mxu0
        %606 = vrot.lane.b32.xlu0 %v538, 64
        %v607 = vpop.permute.xlu0 %606
        %v609 = vsel %vm516, %v583, 0
        %v612 = vsel %vm589, %v607, 0
        %614 = vmatpush.bf16.msra.mxu0 0
        %615 = vmatpush.bf16.msra.mxu0 0
        %616 = vmatpush.bf16.msra.mxu0 0
        %617 = vmatpush.bf16.msra.mxu0 0
        %618 = vmatpush.bf16.msra.mxu0 0
        %619 = vmatpush.bf16.msra.mxu0 0
        %620 = vmatpush.bf16.msra.mxu0 0
        %621 = vmatpush.bf16.msra.mxu0 %v612
        %622 = vmatmul.bf16.gmra.mxu0 %v609
        %v623 = vpop.f32.mrf.mxu0
        %v624 = vadd.f32 0.0, %v623
        %v625 = vpop.f32.mrf.mxu0
        %626 = vdwg.mxu0
        %v628 = vunpack.c.l.b16 %v507
        %v629 = vpack.c.b16 %v628, %v628
        %630 = vrot.lane.b32.xlu0 %v629, 120
        %v631 = vpop.permute.xlu0 %630
        %632 = vrot.lane.b32.xlu0 %v513, 88
        %v633 = vpop.permute.xlu0 %632
        %v635 = vsel %vm516, %v631, 0
        %v638 = vsel %vm516, %v633, 0
        %640 = vmatpush.bf16.xpose.msra.mxu0 0
        %641 = vmatpush.bf16.xpose.msra.mxu0 0
        %642 = vmatpush.bf16.xpose.msra.mxu0 0
        %643 = vmatpush.bf16.xpose.msra.mxu0 0
        %644 = vmatpush.bf16.xpose.msra.mxu0 0
        %645 = vmatpush.bf16.xpose.msra.mxu0 0
        %646 = vmatpush.bf16.xpose.msra.mxu0 0
        %647 = vmatpush.bf16.xpose.msra.mxu0 %v638
        %648 = vmatmul.bf16.gmra.mxu0 %v635
        %v649 = vpop.f32.mrf.mxu0
        %v650 = vadd.f32 0.0, %v649
        %v651 = vpop.f32.mrf.mxu0
        %652 = vdwg.mxu0
        %v654 = vunpack.c.l.b16 %v508
        %v655 = vpack.c.b16 %v654, %v654
        %656 = vrot.lane.b32.xlu0 %v655, 120
        %v657 = vpop.permute.xlu0 %656
        %658 = vrot.lane.b32.xlu0 %v538, 88
        %v659 = vpop.permute.xlu0 %658
        %v661 = vsel %vm516, %v657, 0
        %v664 = vsel %vm516, %v659, 0
        %666 = vmatpush.bf16.xpose.msra.mxu0 0
        %667 = vmatpush.bf16.xpose.msra.mxu0 0
        %668 = vmatpush.bf16.xpose.msra.mxu0 0
        %669 = vmatpush.bf16.xpose.msra.mxu0 0
        %670 = vmatpush.bf16.xpose.msra.mxu0 0
        %671 = vmatpush.bf16.xpose.msra.mxu0 0
        %672 = vmatpush.bf16.xpose.msra.mxu0 0
        %673 = vmatpush.bf16.xpose.msra.mxu0 %v664
        %674 = vmatmul.bf16.gmra.mxu0 %v661
        %v675 = vpop.f32.mrf.mxu0
        %v676 = vadd.f32 0.0, %v675
        %v677 = vpop.f32.mrf.mxu0
        %678 = vdwg.mxu0
        %v679 = vsel %vm516, %v650, -inf
        %680 = vmax.xlane.f32.xlu0 %v679
        %v681 = vpop.xlane.xlu0 %680
        %v682 = vsel %vm516, %v676, -inf
        %683 = vmax.xlane.f32.xlu0 %v682
        %v684 = vpop.xlane.xlu0 %683
        %v685 = vsub.f32 %v650, %v681
        %v686 = vsub.f32 %v676, %v684
        %v687 = vmul.f32 %v685, 1.442695
        %v688 = vpow.pop %v687
        %v689 = vmul.f32 %v686, 1.442695
        %v690 = vpow.pop %v689
        %v691 = vsel %vm516, %v688, 0.0
        %692 = vadd.xlane.f32.xlu0 %v691
        %v693 = vpop.xlane.xlu0 %692
        %v694 = vsel %vm516, %v690, 0.0
        %695 = vadd.xlane.f32.xlu0 %v694
        %v696 = vpop.xlane.xlu0 %695
        %v697 = vrcp.pop %v693
        %v698 = vrcp.pop %v696
        %v699 = vmul.f32 %v688, %v697
        %v700 = vmul.f32 %v690, %v698
        %v701 = vpack.c.bf16 %v699, %v699
        %v702 = vpack.c.bf16 %v700, %v700
        %703 = vrot.lane.b32.xlu0 %v513, 56
        %v704 = vpop.permute.xlu0 %703
        %v706 = vsel %vm516, %v701, 0
        %v709 = vsel %vm589, %v704, 0
        %711 = vmatpush.bf16.msra.mxu0 0
        %712 = vmatpush.bf16.msra.mxu0 0
        %713 = vmatpush.bf16.msra.mxu0 0
        %714 = vmatpush.bf16.msra.mxu0 0
        %715 = vmatpush.bf16.msra.mxu0 0
        %716 = vmatpush.bf16.msra.mxu0 0
        %717 = vmatpush.bf16.msra.mxu0 0
        %718 = vmatpush.bf16.msra.mxu0 %v709
        %719 = vmatmul.bf16.gmra.mxu0 %v706
        %v720 = vpop.f32.mrf.mxu0
        %v721 = vadd.f32 0.0, %v720
        %v722 = vpop.f32.mrf.mxu0
        %723 = vdwg.mxu0
        %724 = vrot.lane.b32.xlu0 %v538, 56
        %v725 = vpop.permute.xlu0 %724
        %v727 = vsel %vm516, %v702, 0
        %v730 = vsel %vm589, %v725, 0
        %732 = vmatpush.bf16.msra.mxu0 0
        %733 = vmatpush.bf16.msra.mxu0 0
        %734 = vmatpush.bf16.msra.mxu0 0
        %735 = vmatpush.bf16.msra.mxu0 0
        %736 = vmatpush.bf16.msra.mxu0 0
        %737 = vmatpush.bf16.msra.mxu0 0
        %738 = vmatpush.bf16.msra.mxu0 0
        %739 = vmatpush.bf16.msra.mxu0 %v730
        %740 = vmatmul.bf16.gmra.mxu0 %v727
        %v741 = vpop.f32.mrf.mxu0
        %v742 = vadd.f32 0.0, %v741
        %v743 = vpop.f32.mrf.mxu0
        %744 = vdwg.mxu0
        %745 = vrot.lane.b32.xlu0 %v629, 112
        %v746 = vpop.permute.xlu0 %745
        %747 = vrot.lane.b32.xlu0 %v513, 80
        %v748 = vpop.permute.xlu0 %747
        %v750 = vsel %vm516, %v746, 0
        %v753 = vsel %vm516, %v748, 0
        %755 = vmatpush.bf16.xpose.msra.mxu0 0
        %756 = vmatpush.bf16.xpose.msra.mxu0 0
        %757 = vmatpush.bf16.xpose.msra.mxu0 0
        %758 = vmatpush.bf16.xpose.msra.mxu0 0
        %759 = vmatpush.bf16.xpose.msra.mxu0 0
        %760 = vmatpush.bf16.xpose.msra.mxu0 0
        %761 = vmatpush.bf16.xpose.msra.mxu0 0
        %762 = vmatpush.bf16.xpose.msra.mxu0 %v753
        %763 = vmatmul.bf16.gmra.mxu0 %v750
        %v764 = vpop.f32.mrf.mxu0
        %v765 = vadd.f32 0.0, %v764
        %v766 = vpop.f32.mrf.mxu0
        %767 = vdwg.mxu0
        %768 = vrot.lane.b32.xlu0 %v655, 112
        %v769 = vpop.permute.xlu0 %768
        %770 = vrot.lane.b32.xlu0 %v538, 80
        %v771 = vpop.permute.xlu0 %770
        %v773 = vsel %vm516, %v769, 0
        %v776 = vsel %vm516, %v771, 0
        %778 = vmatpush.bf16.xpose.msra.mxu0 0
        %779 = vmatpush.bf16.xpose.msra.mxu0 0
        %780 = vmatpush.bf16.xpose.msra.mxu0 0
        %781 = vmatpush.bf16.xpose.msra.mxu0 0
        %782 = vmatpush.bf16.xpose.msra.mxu0 0
        %783 = vmatpush.bf16.xpose.msra.mxu0 0
        %784 = vmatpush.bf16.xpose.msra.mxu0 0
        %785 = vmatpush.bf16.xpose.msra.mxu0 %v776
        %786 = vmatmul.bf16.gmra.mxu0 %v773
        %v787 = vpop.f32.mrf.mxu0
        %v788 = vadd.f32 0.0, %v787
        %v789 = vpop.f32.mrf.mxu0
        %790 = vdwg.mxu0
        %v791 = vsel %vm516, %v765, -inf
        %792 = vmax.xlane.f32.xlu0 %v791
        %v793 = vpop.xlane.xlu0 %792
        %v794 = vsel %vm516, %v788, -inf
        %795 = vmax.xlane.f32.xlu0 %v794
        %v796 = vpop.xlane.xlu0 %795
        %v797 = vsub.f32 %v765, %v793
        %v798 = vsub.f32 %v788, %v796
        %v799 = vmul.f32 %v797, 1.442695
        %v800 = vpow.pop %v799
        %v801 = vmul.f32 %v798, 1.442695
        %v802 = vpow.pop %v801
        %v803 = vsel %vm516, %v800, 0.0
        %804 = vadd.xlane.f32.xlu0 %v803
        %v805 = vpop.xlane.xlu0 %804
        %v806 = vsel %vm516, %v802, 0.0
        %807 = vadd.xlane.f32.xlu0 %v806
        %v808 = vpop.xlane.xlu0 %807
        %v809 = vrcp.pop %v805
        %v810 = vrcp.pop %v808
        %v811 = vmul.f32 %v800, %v809
        %v812 = vmul.f32 %v802, %v810
        %v813 = vpack.c.bf16 %v811, %v811
        %v814 = vpack.c.bf16 %v812, %v812
        %815 = vrot.lane.b32.xlu0 %v513, 48
        %v816 = vpop.permute.xlu0 %815
        %v818 = vsel %vm516, %v813, 0
        %v821 = vsel %vm589, %v816, 0
        %823 = vmatpush.bf16.msra.mxu0 0
        %824 = vmatpush.bf16.msra.mxu0 0
        %825 = vmatpush.bf16.msra.mxu0 0
        %826 = vmatpush.bf16.msra.mxu0 0
        %827 = vmatpush.bf16.msra.mxu0 0
        %828 = vmatpush.bf16.msra.mxu0 0
        %829 = vmatpush.bf16.msra.mxu0 0
        %830 = vmatpush.bf16.msra.mxu0 %v821
        %831 = vmatmul.bf16.gmra.mxu0 %v818
        %v832 = vpop.f32.mrf.mxu0
        %v833 = vadd.f32 0.0, %v832
        %v834 = vpop.f32.mrf.mxu0
        %835 = vdwg.mxu0
        %836 = vrot.lane.b32.xlu0 %v538, 48
        %v837 = vpop.permute.xlu0 %836
        %v839 = vsel %vm516, %v814, 0
        %v842 = vsel %vm589, %v837, 0
        %844 = vmatpush.bf16.msra.mxu0 0
        %845 = vmatpush.bf16.msra.mxu0 0
        %846 = vmatpush.bf16.msra.mxu0 0
        %847 = vmatpush.bf16.msra.mxu0 0
        %848 = vmatpush.bf16.msra.mxu0 0
        %849 = vmatpush.bf16.msra.mxu0 0
        %850 = vmatpush.bf16.msra.mxu0 0
        %851 = vmatpush.bf16.msra.mxu0 %v842
        %852 = vmatmul.bf16.gmra.mxu0 %v839
        %v853 = vpop.f32.mrf.mxu0
        %v854 = vadd.f32 0.0, %v853
        %v855 = vpop.f32.mrf.mxu0
        %856 = vdwg.mxu0
        %857 = vrot.lane.b32.xlu0 %v629, 104
        %v858 = vpop.permute.xlu0 %857
        %859 = vrot.lane.b32.xlu0 %v513, 72
        %v860 = vpop.permute.xlu0 %859
        %v862 = vsel %vm516, %v858, 0
        %v865 = vsel %vm516, %v860, 0
        %867 = vmatpush.bf16.xpose.msra.mxu0 0
        %868 = vmatpush.bf16.xpose.msra.mxu0 0
        %869 = vmatpush.bf16.xpose.msra.mxu0 0
        %870 = vmatpush.bf16.xpose.msra.mxu0 0
        %871 = vmatpush.bf16.xpose.msra.mxu0 0
        %872 = vmatpush.bf16.xpose.msra.mxu0 0
        %873 = vmatpush.bf16.xpose.msra.mxu0 0
        %874 = vmatpush.bf16.xpose.msra.mxu0 %v865
        %875 = vmatmul.bf16.gmra.mxu0 %v862
        %v876 = vpop.f32.mrf.mxu0
        %v877 = vadd.f32 0.0, %v876
        %v878 = vpop.f32.mrf.mxu0
        %879 = vdwg.mxu0
        %880 = vrot.lane.b32.xlu0 %v655, 104
        %v881 = vpop.permute.xlu0 %880
        %882 = vrot.lane.b32.xlu0 %v538, 72
        %v883 = vpop.permute.xlu0 %882
        %v885 = vsel %vm516, %v881, 0
        %v888 = vsel %vm516, %v883, 0
        %890 = vmatpush.bf16.xpose.msra.mxu0 0
        %891 = vmatpush.bf16.xpose.msra.mxu0 0
        %892 = vmatpush.bf16.xpose.msra.mxu0 0
        %893 = vmatpush.bf16.xpose.msra.mxu0 0
        %894 = vmatpush.bf16.xpose.msra.mxu0 0
        %895 = vmatpush.bf16.xpose.msra.mxu0 0
        %896 = vmatpush.bf16.xpose.msra.mxu0 0
        %897 = vmatpush.bf16.xpose.msra.mxu0 %v888
        %898 = vmatmul.bf16.gmra.mxu0 %v885
        %v899 = vpop.f32.mrf.mxu0
        %v900 = vadd.f32 0.0, %v899
        %v901 = vpop.f32.mrf.mxu0
        %902 = vdwg.mxu0
        %v903 = vsel %vm516, %v877, -inf
        %904 = vmax.xlane.f32.xlu0 %v903
        %v905 = vpop.xlane.xlu0 %904
        %v906 = vsel %vm516, %v900, -inf
        %907 = vmax.xlane.f32.xlu0 %v906
        %v908 = vpop.xlane.xlu0 %907
        %v909 = vsub.f32 %v877, %v905
        %v910 = vsub.f32 %v900, %v908
        %v911 = vmul.f32 %v909, 1.442695
        %v912 = vpow.pop %v911
        %v913 = vmul.f32 %v910, 1.442695
        %v914 = vpow.pop %v913
        %v915 = vsel %vm516, %v912, 0.0
        %916 = vadd.xlane.f32.xlu0 %v915
        %v917 = vpop.xlane.xlu0 %916
        %v918 = vsel %vm516, %v914, 0.0
        %919 = vadd.xlane.f32.xlu0 %v918
        %v920 = vpop.xlane.xlu0 %919
        %v921 = vrcp.pop %v917
        %v922 = vrcp.pop %v920
        %v923 = vmul.f32 %v912, %v921
        %v924 = vmul.f32 %v914, %v922
        %v925 = vpack.c.bf16 %v923, %v923
        %v926 = vpack.c.bf16 %v924, %v924
        %927 = vrot.lane.b32.xlu0 %v513, 40
        %v928 = vpop.permute.xlu0 %927
        %v930 = vsel %vm516, %v925, 0
        %v933 = vsel %vm589, %v928, 0
        %935 = vmatpush.bf16.msra.mxu0 0
        %936 = vmatpush.bf16.msra.mxu0 0
        %937 = vmatpush.bf16.msra.mxu0 0
        %938 = vmatpush.bf16.msra.mxu0 0
        %939 = vmatpush.bf16.msra.mxu0 0
        %940 = vmatpush.bf16.msra.mxu0 0
        %941 = vmatpush.bf16.msra.mxu0 0
        %942 = vmatpush.bf16.msra.mxu0 %v933
        %943 = vmatmul.bf16.gmra.mxu0 %v930
        %v944 = vpop.f32.mrf.mxu0
        %v945 = vadd.f32 0.0, %v944
        %v946 = vpop.f32.mrf.mxu0
        %947 = vdwg.mxu0
        %948 = vrot.lane.b32.xlu0 %v538, 40
        %v949 = vpop.permute.xlu0 %948
        %v951 = vsel %vm516, %v926, 0
        %v954 = vsel %vm589, %v949, 0
        %956 = vmatpush.bf16.msra.mxu0 0
        %957 = vmatpush.bf16.msra.mxu0 0
        %958 = vmatpush.bf16.msra.mxu0 0
        %959 = vmatpush.bf16.msra.mxu0 0
        %960 = vmatpush.bf16.msra.mxu0 0
        %961 = vmatpush.bf16.msra.mxu0 0
        %962 = vmatpush.bf16.msra.mxu0 0
        %963 = vmatpush.bf16.msra.mxu0 %v954
        %964 = vmatmul.bf16.gmra.mxu0 %v951
        %v965 = vpop.f32.mrf.mxu0
        %v966 = vadd.f32 0.0, %v965
        %v967 = vpop.f32.mrf.mxu0
        %968 = vdwg.mxu0
        %971 = vrot.lane.b32.xlu0 %v721, 8
        %v972 = vpop.permute.xlu0 %971
        %973 = vrot.lane.b32.xlu0 %v742, 8
        %v974 = vpop.permute.xlu0 %973
        %979 = vrot.lane.b32.xlu0 %v833, 16
        %v980 = vpop.permute.xlu0 %979
        %981 = vrot.lane.b32.xlu0 %v854, 16
        %v982 = vpop.permute.xlu0 %981
        %987 = vrot.lane.b32.xlu0 %v945, 24
        %v988 = vpop.permute.xlu0 %987
        %989 = vrot.lane.b32.xlu0 %v966, 24
        %v990 = vpop.permute.xlu0 %989
        %v993 = vsel %vm516, %v603, %v972
        %v994 = vsel %vm516, %v624, %v974
        %vm995 = vcmask 130048
        %v996 = vsel %vm995, %v993, %v980
        %v997 = vsel %vm995, %v994, %v982
        %vm998 = vcmask 195584
        %v999 = vsel %vm998, %v996, %v988
        %v1000 = vsel %vm998, %v997, %v990
        %v1001 = vpack.c.bf16 %v1000, %v999
        %v1002 = vld [vmem:[%s438] sm:$0xf]
        %v1003 = vld [vmem:[%s438 + $0x4] sm:$0xf]
        %v1004 = vld [vmem:[%s438 + $0x8] sm:$0xf]
        %v1005 = vld [vmem:[%s438 + $0xc] sm:$0xf]
        %v1006 = vperm.slane %v465, 0
        %v1011 = vunpack.c.l.b16 %v1002
        %v1012 = vunpack.c.l.b16 %v1003
        %v1013 = vunpack.c.l.b16 %v1004
        %v1014 = vunpack.c.l.b16 %v1005
        %v1015 = vpack.c.b16 %v1012, %v1011
        %v1016 = vpack.c.b16 %v1014, %v1013
        %v1020 = vsel %vm487, %v1001, 0
        %1022 = vmatpush.bf16.msra.mxu0 0
        %1023 = vmatpush.bf16.msra.mxu0 0
        %1024 = vmatpush.bf16.msra.mxu0 0
        %1025 = vmatpush.bf16.msra.mxu0 0
        %1026 = vmatpush.bf16.msra.mxu0 0
        %1027 = vmatpush.bf16.msra.mxu0 0
        %1028 = vmatpush.bf16.msra.mxu0 %v1016
        %1029 = vmatpush.bf16.msra.mxu0 %v1015
        %1030 = vmatmul.bf16.gmra.mxu0 %v1020
        %v1031 = vpop.f32.mrf.mxu0
        %v1032 = vadd.f32 %v1006, %v1031
        %v1033 = vpop.f32.mrf.mxu0
        %v1034 = vadd.f32 %v1006, %v1033
        %1035 = vdwg.mxu0
        %v1036 = vadd.f32 %v463, %v1032
        %v1037 = vadd.f32 %v464, %v1034
        %v1038 = vsel %vm487, %v1036, 0.0
        %1039 = vadd.xlane.f32.xlu0 %v1038
        %v1040 = vpop.xlane.xlu0 %1039
        %v1041 = vsel %vm487, %v1037, 0.0
        %1042 = vadd.xlane.f32.xlu0 %v1041
        %v1043 = vpop.xlane.xlu0 %1042
        %v1044 = vrcp.pop 32.0
        %v1045 = vmul.f32 32.0, %v1044
        %v1046 = vsub.f32 1.0, %v1045
        %v1047 = vmul.f32 %v1044, %v1046
        %v1048 = vadd.f32 %v1044, %v1047
        %vm1049 = vweird.f32 %v1044
        %v1050 = vsel %vm1049, %v1044, %v1048
        %v1051 = vmul.f32 %v1040, %v1050
        %v1052 = vmul.f32 %v1043, %v1050
        %v1053 = vsub.f32 %v1036, %v1051
        %v1054 = vsub.f32 %v1037, %v1052
        %v1055 = vmul.f32 %v1053, %v1053
        %v1056 = vmul.f32 %v1054, %v1054
        %v1057 = vsel %vm487, %v1055, 0.0
        %1058 = vadd.xlane.f32.xlu0 %v1057
        %v1059 = vpop.xlane.xlu0 %1058
        %v1060 = vsel %vm487, %v1056, 0.0
        %1061 = vadd.xlane.f32.xlu0 %v1060
        %v1062 = vpop.xlane.xlu0 %1061
        %v1063 = vmul.f32 %v1059, %v1050
        %v1064 = vmul.f32 %v1062, %v1050
        %v1065 = vadd.f32 %v1063, 1e-05
        %v1066 = vadd.f32 %v1064, 1e-05
        %v1067 = vrsqrt.pop %v1065
        %v1068 = vmul.f32 %v1067, %v1065
        %v1069 = vmul.f32 %v1068, %v1067
        %v1070 = vmul.f32 0.5, %v1069
        %v1071 = vsub.f32 1.5, %v1070
        %v1072 = vmul.f32 %v1067, %v1071
        %vm1073 = vweird.f32 %v1065
        %vm1074 = vweird.f32 %v1067
        %vm1075 = vmor %vm1073, %vm1074
        %v1076 = vsel %vm1075, %v1067, %v1072
        %v1077 = vrsqrt.pop %v1066
        %v1078 = vmul.f32 %v1077, %v1066
        %v1079 = vmul.f32 %v1078, %v1077
        %v1080 = vmul.f32 0.5, %v1079
        %v1081 = vsub.f32 1.5, %v1080
        %v1082 = vmul.f32 %v1077, %v1081
        %vm1083 = vweird.f32 %v1066
        %vm1084 = vweird.f32 %v1077
        %vm1085 = vmor %vm1083, %vm1084
        %v1086 = vsel %vm1085, %v1077, %v1082
        %v1087 = vmul.f32 %v1053, %v1076
        %v1088 = vmul.f32 %v1054, %v1086
        %v1089 = vperm.slane %v465, 1
        %v1090 = vmul.f32 %v1087, %v1089
        %v1091 = vmul.f32 %v1088, %v1089
        %v1092 = vperm.slane %v465, 2
        %v1093 = vadd.f32 %v1090, %v1092
        %v1094 = vadd.f32 %v1091, %v1092
        %v1095 = vpack.c.bf16 %v1094, %v1093
        %v1096 = vld [vmem:[%s443] sm:$0xf]
        %v1097 = vld [vmem:[%s443 + $0x4] sm:$0xf]
        %v1098 = vld [vmem:[%s443 + $0x8] sm:$0xf]
        %v1099 = vld [vmem:[%s443 + $0xc] sm:$0xf]
        %v1100 = vld [vmem:[%s373] sm:$0x1]
        %v1102 = vperm.slane %v1100, 0
        %v1108 = vunpack.c.l.b16 %v1096
        %v1109 = vunpack.c.l.b16 %v1097
        %v1110 = vunpack.c.l.b16 %v1098
        %v1111 = vunpack.c.l.b16 %v1099
        %v1112 = vpack.c.b16 %v1109, %v1108
        %v1113 = vpack.c.b16 %v1111, %v1110
        %v1117 = vsel %vm487, %v1095, 0
        %1119 = vmatpush.bf16.msra.mxu0 0
        %1120 = vmatpush.bf16.msra.mxu0 0
        %1121 = vmatpush.bf16.msra.mxu0 0
        %1122 = vmatpush.bf16.msra.mxu0 0
        %1123 = vmatpush.bf16.msra.mxu0 0
        %1124 = vmatpush.bf16.msra.mxu0 0
        %1125 = vmatpush.bf16.msra.mxu0 %v1113
        %1126 = vmatpush.bf16.msra.mxu0 %v1112
        %1127 = vmatmul.bf16.gmra.mxu0 %v1117
        %v1128 = vpop.f32.mrf.mxu0
        %v1129 = vadd.f32 %v1102, %v1128
        %v1130 = vpop.f32.mrf.mxu0
        %v1131 = vadd.f32 %v1102, %v1130
        %1132 = vdwg.mxu0
        %v1133 = vmul.f32 %v1129, 0.5
        %v1134 = vmul.f32 %v1131, 0.5
        %v1135 = vmul.f32 %v1129, 0.70710677
        %v1136 = vmul.f32 %v1131, 0.70710677
        %v1137 = vand.u32 2147483647, %v1135
        %v1138 = vand.u32 2147483647, %v1136
        %v1139 = vmul.f32 %v1137, 0.3275911
        %v1140 = vmul.f32 %v1138, 0.3275911
        %v1141 = vadd.f32 %v1139, 1.0
        %v1142 = vadd.f32 %v1140, 1.0
        %v1143 = vrcp.pop %v1141
        %v1144 = vmul.f32 %v1141, %v1143
        %v1145 = vsub.f32 1.0, %v1144
        %v1146 = vmul.f32 %v1143, %v1145
        %v1147 = vadd.f32 %v1143, %v1146
        %vm1148 = vweird.f32 %v1141
        %vm1149 = vweird.f32 %v1143
        %vm1150 = vmor %vm1148, %vm1149
        %v1151 = vsel %vm1150, %v1143, %v1147
        %v1152 = vand.u32 2147483647, %v1141
        %vm1153 = vcmp.eq.f32.partialorder %v1152, 8.507059e+37
        %v1154 = vand.u32 %v1141, 2147483648
        %v1155 = vor.u32 1.1754944e-38, %v1154
        %v1156 = vsel %vm1153, %v1155, %v1151
        %v1157 = vmul.f32 1.0, %v1156
        %v1158 = vrcp.pop %v1142
        %v1159 = vmul.f32 %v1142, %v1158
        %v1160 = vsub.f32 1.0, %v1159
        %v1161 = vmul.f32 %v1158, %v1160
        %v1162 = vadd.f32 %v1158, %v1161
        %vm1163 = vweird.f32 %v1142
        %vm1164 = vweird.f32 %v1158
        %vm1165 = vmor %vm1163, %vm1164
        %v1166 = vsel %vm1165, %v1158, %v1162
        %v1167 = vand.u32 2147483647, %v1142
        %vm1168 = vcmp.eq.f32.partialorder %v1167, 8.507059e+37
        %v1169 = vand.u32 %v1142, 2147483648
        %v1170 = vor.u32 1.1754944e-38, %v1169
        %v1171 = vsel %vm1168, %v1170, %v1166
        %v1172 = vmul.f32 1.0, %v1171
        %v1173 = vmul.f32 %v1157, 1.0614054
        %v1174 = vmul.f32 %v1172, 1.0614054
        %v1175 = vsub.f32 %v1173, 1.4531521
        %v1176 = vsub.f32 %v1174, 1.4531521
        %v1177 = vmul.f32 %v1175, %v1157
        %v1178 = vmul.f32 %v1176, %v1172
        %v1179 = vadd.f32 %v1177, 1.4214138
        %v1180 = vadd.f32 %v1178, 1.4214138
        %v1181 = vmul.f32 %v1179, %v1157
        %v1182 = vmul.f32 %v1180, %v1172
        %v1183 = vsub.f32 %v1181, 0.28449672
        %v1184 = vsub.f32 %v1182, 0.28449672
        %v1185 = vmul.f32 %v1183, %v1157
        %v1186 = vmul.f32 %v1184, %v1172
        %v1187 = vadd.f32 %v1185, 0.2548296
        %v1188 = vadd.f32 %v1186, 0.2548296
        %v1189 = vmul.f32 %v1187, %v1157
        %v1190 = vmul.f32 %v1188, %v1172
        %v1191 = vsub.f32 0.0, %v1137
        %v1192 = vsub.f32 0.0, %v1138
        %v1193 = vmul.f32 %v1191, %v1137
        %v1194 = vmul.f32 %v1192, %v1138
        %v1195 = vmul.f32 %v1193, 1.442695
        %v1196 = vpow.pop %v1195
        %v1197 = vmul.f32 %v1194, 1.442695
        %v1198 = vpow.pop %v1197
        %v1199 = vmul.f32 %v1189, %v1196
        %v1200 = vmul.f32 %v1190, %v1198
        %v1201 = vsub.f32 1.0, %v1199
        %v1202 = vsub.f32 1.0, %v1200
        %vm1203 = vcmp.ge.f32.partialorder %v1135, 0.0
        %vm1204 = vcmp.ge.f32.partialorder %v1136, 0.0
        %v1205 = vsub.f32 0.0, %v1201
        %v1206 = vsub.f32 0.0, %v1202
        %v1207 = vsel %vm1203, %v1201, %v1205
        %v1208 = vsel %vm1204, %v1202, %v1206
        %v1209 = vadd.f32 %v1207, 1.0
        %v1210 = vadd.f32 %v1208, 1.0
        %v1211 = vmul.f32 %v1133, %v1209
        %v1212 = vmul.f32 %v1134, %v1210
        %v1213 = vpack.c.bf16 %v1212, %v1211
        %v1214 = vld [vmem:[%s448] sm:$0xf]
        %v1215 = vld [vmem:[%s448 + $0x4] sm:$0xf]
        %v1216 = vld [vmem:[%s448 + $0x8] sm:$0xf]
        %v1217 = vld [vmem:[%s448 + $0xc] sm:$0xf]
        %v1218 = vld [vmem:[%s448 + $0x10] sm:$0xf]
        %v1219 = vld [vmem:[%s448 + $0x14] sm:$0xf]
        %v1220 = vld [vmem:[%s448 + $0x18] sm:$0xf]
        %v1221 = vld [vmem:[%s448 + $0x1c] sm:$0xf]
        %v1222 = vperm.slane %v465, 3
        %v1231 = vunpack.c.l.b16 %v1214
        %v1232 = vunpack.c.l.b16 %v1215
        %v1233 = vunpack.c.l.b16 %v1216
        %v1234 = vunpack.c.l.b16 %v1217
        %v1235 = vunpack.c.l.b16 %v1218
        %v1236 = vunpack.c.l.b16 %v1219
        %v1237 = vunpack.c.l.b16 %v1220
        %v1238 = vunpack.c.l.b16 %v1221
        %v1239 = vpack.c.b16 %v1232, %v1231
        %v1240 = vpack.c.b16 %v1234, %v1233
        %v1241 = vpack.c.b16 %v1236, %v1235
        %v1242 = vpack.c.b16 %v1238, %v1237
        %vm1247 = vcmask 523264
        %v1249 = vsel %vm1247, %v1213, 0
        %1251 = vmatpush.bf16.msra.mxu0 0
        %1252 = vmatpush.bf16.msra.mxu0 0
        %1253 = vmatpush.bf16.msra.mxu0 0
        %1254 = vmatpush.bf16.msra.mxu0 0
        %1255 = vmatpush.bf16.msra.mxu0 %v1242
        %1256 = vmatpush.bf16.msra.mxu0 %v1241
        %1257 = vmatpush.bf16.msra.mxu0 %v1240
        %1258 = vmatpush.bf16.msra.mxu0 %v1239
        %1259 = vmatmul.bf16.gmra.mxu0 %v1249
        %v1260 = vpop.f32.mrf.mxu0
        %v1261 = vadd.f32 %v1222, %v1260
        %v1262 = vpop.f32.mrf.mxu0
        %v1263 = vadd.f32 %v1222, %v1262
        %1264 = vdwg.mxu0
        %v1265 = vadd.f32 %v1093, %v1261
        %v1266 = vadd.f32 %v1094, %v1263
        %v1267 = vsel %vm487, %v1265, 0.0
        %1268 = vadd.xlane.f32.xlu0 %v1267
        %v1269 = vpop.xlane.xlu0 %1268
        %v1270 = vsel %vm487, %v1266, 0.0
        %1271 = vadd.xlane.f32.xlu0 %v1270
        %v1272 = vpop.xlane.xlu0 %1271
        %v1273 = vmul.f32 %v1269, %v1050
        %v1274 = vmul.f32 %v1272, %v1050
        %v1275 = vsub.f32 %v1265, %v1273
        %v1276 = vsub.f32 %v1266, %v1274
        %v1277 = vmul.f32 %v1275, %v1275
        %v1278 = vmul.f32 %v1276, %v1276
        %v1279 = vsel %vm487, %v1277, 0.0
        %1280 = vadd.xlane.f32.xlu0 %v1279
        %v1281 = vpop.xlane.xlu0 %1280
        %v1282 = vsel %vm487, %v1278, 0.0
        %1283 = vadd.xlane.f32.xlu0 %v1282
        %v1284 = vpop.xlane.xlu0 %1283
        %v1285 = vmul.f32 %v1281, %v1050
        %v1286 = vmul.f32 %v1284, %v1050
        %v1287 = vadd.f32 %v1285, 1e-05
        %v1288 = vadd.f32 %v1286, 1e-05
        %v1289 = vrsqrt.pop %v1287
        %v1290 = vmul.f32 %v1289, %v1287
        %v1291 = vmul.f32 %v1290, %v1289
        %v1292 = vmul.f32 0.5, %v1291
        %v1293 = vsub.f32 1.5, %v1292
        %v1294 = vmul.f32 %v1289, %v1293
        %vm1295 = vweird.f32 %v1287
        %vm1296 = vweird.f32 %v1289
        %vm1297 = vmor %vm1295, %vm1296
        %v1298 = vsel %vm1297, %v1289, %v1294
        %v1299 = vrsqrt.pop %v1288
        %v1300 = vmul.f32 %v1299, %v1288
        %v1301 = vmul.f32 %v1300, %v1299
        %v1302 = vmul.f32 0.5, %v1301
        %v1303 = vsub.f32 1.5, %v1302
        %v1304 = vmul.f32 %v1299, %v1303
        %vm1305 = vweird.f32 %v1288
        %vm1306 = vweird.f32 %v1299
        %vm1307 = vmor %vm1305, %vm1306
        %v1308 = vsel %vm1307, %v1299, %v1304
        %v1309 = vmul.f32 %v1275, %v1298
        %v1310 = vmul.f32 %v1276, %v1308
        %v1311 = vperm.slane %v465, 4
        %v1312 = vmul.f32 %v1309, %v1311
        %v1313 = vmul.f32 %v1310, %v1311
        %v1314 = vperm.slane %v465, 5
        %v1315 = vadd.f32 %v1312, %v1314
        %v1316 = vadd.f32 %v1313, %v1314
        %1317 = vst.msk [vmem:[#allocation2] sm:$0xff] %vm487, %v1315
        %1318 = vst.msk [vmem:[#allocation2 + $0x8] sm:$0xff] %vm487, %v1316
        %p1319 = scmp.eq.s32.totalorder %s24, 1
        // Predicated region
        $region69: #{tpu_custom_call.1} parent=51 // pred_check
          %p1320 = pneg %p1319
        $region70: #{tpu_custom_call.1} parent=51 // pred_check_branch
          %1322 = sbr.rel (%p1320) target = $region72
        $region71: #{tpu_custom_call.1} parent=51 // pred_region
          %1323 = vst.msk [vmem:[#allocation9] sm:$0xff] %vm487, %v1315
          %1324 = vst.msk [vmem:[#allocation9 + $0x8] sm:$0xff] %vm487, %v1316
        $region72: #{tpu_custom_call.1} parent=51 // pred_fallthru
          _
        // Predicated region
        $region73: #{tpu_custom_call.1} parent=51 // pred_check
          %p1325 = pneg %p240
        $region74: #{tpu_custom_call.1} parent=51 // pred_check_branch
          %1327 = sbr.rel (%p1325) target = $region76
        $region75: #{tpu_custom_call.1} parent=51 // pred_region
          %1329 = vsyncadd [#allocation5], 0
          %s1330 = sshll.u32 [#allocation9], 4
          %s1331 = int_to_ptr.vmem [resolvable:$true] %s1330
          %s1332 = sshll.u32 %s8, 4
          %s1333 = int_to_ptr.hbm [resolvable:$true] %s1332
          %1338 = dma.vmem_to_hbm [thread:$0]  %s1331, 256, %s1333, [#allocation5], 128, 128, 8
        $region76: #{tpu_custom_call.1} parent=51 // pred_fallthru
          _
        // Predicated region
        $region77: #{tpu_custom_call.1} parent=51 // pred_check
          %p1339 = pneg %p240
        $region78: #{tpu_custom_call.1} parent=51 // pred_check_branch
          %1341 = sbr.rel (%p1339) target = $region80
        $region79: #{tpu_custom_call.1} parent=51 // pred_region
          %1343 = dma.done [#allocation5], 256
        $region80: #{tpu_custom_call.1} parent=51 // pred_fallthru
          _
      $region52: #{tpu_custom_call.1} parent=5 // pred_fallthru
        _
      %p1344 = scmp.le.s32.totalorder 2, %s19
      // Predicated region
      $region81: #{tpu_custom_call.1} parent=5 // pred_check
        %p1345 = pneg %p1344
      $region82: #{tpu_custom_call.1} parent=5 // pred_check_branch
        %1347 = sbr.rel (%p1345) target = $region84
      $region83: #{tpu_custom_call.1} parent=5 // pred_region
        %s1348 = ssub.s32 %s19, 2
      $region84: #{tpu_custom_call.1} parent=5 // pred_fallthru
        _
    $region6: #{tpu_custom_call.1} parent=1 // loop_footer
      %s23 = sadd.s32 1, %s19
    $region7: #{tpu_custom_call.1} parent=1 // loop_footer_branch
      %18 = sbr.rel target = $region3
    $region8: #{tpu_custom_call.1} parent=1 // loop_exit
      _
    %1349 = vsyncpa [#allocation4], 1
    %s1350 = scalar_lea.sflag [#allocation4], 1
    %1351 = vsyncpa %s1350, 1
    %1352 = vsyncpa [#allocation7], 1
    %s1353 = scalar_lea.sflag [#allocation7], 1
    %1354 = vsyncpa %s1353, 1
    %1355 = vsyncpa [#allocation5], 1
    %s1356 = scalar_lea.sflag [#allocation5], 1
    %1357 = vsyncpa %s1356, 1

</llo_original>
